<compile_context>
chip_gen: v7x
topology: tpu7x:2x2x1
jax: 0.10.0
libtpu: 0.0.40
codegen_flags: <defaults>
</compile_context>

<pallas_src>
import jax
import jax.numpy as jnp
import numpy as np
from jax import lax
from jax.experimental import pallas as pl
from jax.experimental.pallas import tpu as pltpu

# Problem sizes: state_dim = (H, W, C) = (5, 4, 4) so Flatten() -> 25*3*2 = 150,
# matching nn.Linear(25*3*2, hidden) in the PyTorch module.
H, W, C_IN = 5, 4, 4
C1 = 25                          # conv channels
HO, WO = H - 2, W - 2            # 3 x 2 after the final 'valid' 3x3 conv
FLAT = C1 * HO * WO              # 150
HIDDEN = 32
ACTIONS = 6
SLOPE = 0.01                     # nn.LeakyReLU default negative_slope

IN_FEAT = H * W * C_IN           # 80  : NHWC-flattened input row
MID_FEAT = H * W * C1            # 500 : NHWC-flattened conv1/conv2 output row


def _leaky(x):
    return jnp.where(x >= 0, x, SLOPE * x)


# ----------------------------------------------------------------------------
# Wrapper-side weight prep (one-time; would be precomputed/cached in a real
# deployment).  Builds the dense "conv as one matmul" operator matrix T such
# that  X_nhwc_flat @ T == conv(X)  with rows = NHWC-flattened input positions
# and columns = NHWC- (or NCHW-) flattened output positions.  Built by pushing
# one-hot basis images through lax.conv itself, so the padding semantics match
# the reference exactly.
# ----------------------------------------------------------------------------
def _conv_operator(w_hwio, hi, wi, padding, out_nchw=False):
    kh, kw, ci, co = w_hwio.shape
    k = hi * wi * ci
    basis = jnp.eye(k, dtype=jnp.float32).reshape(k, hi, wi, ci)
    basis = jnp.transpose(basis, (0, 3, 1, 2))                       # NCHW basis images
    y = lax.conv_general_dilated(
        basis, w_hwio, (1, 1), padding,
        dimension_numbers=('NCHW', 'HWIO', 'NCHW'),
        precision=lax.Precision.HIGHEST)                             # (k, co, ho, wo)
    if out_nchw:
        return y.reshape(k, -1)                                      # cols (co, ho, wo)
    return jnp.transpose(y, (0, 2, 3, 1)).reshape(k, -1)             # cols (ho, wo, co)


# ----------------------------------------------------------------------------
# Fused kernel: 3 convs (one matmul each, flatten folded into conv3's columns)
# + 3-layer MLP + softmax.  Pure matmul/elementwise; no scratch, no copies.
# ----------------------------------------------------------------------------
def _policy_kernel(x_ref, t1_ref, b1_ref, t2_ref, b2_ref, t3_ref, b3_ref,
                   wl1_ref, bl1_ref, wl2_ref, bl2_ref, wl3_ref, bl3_ref,
                   out_ref):
    f32 = jnp.float32
    bf16 = jnp.bfloat16

    # conv1 (5x5 'same') / conv2 (3x3 'same') / conv3 (3x3 'valid') + flatten.
    # bf16 MXU operands, f32 accumulation; all elementwise math stays f32.
    y = jnp.dot(x_ref[...].astype(bf16), t1_ref[...], preferred_element_type=f32)
    y = _leaky(y + b1_ref[...])                                   # (bn, 500) NHWC rows
    y = jnp.dot(y.astype(bf16), t2_ref[...], preferred_element_type=f32)
    y = _leaky(y + b2_ref[...])                                   # (bn, 500) NHWC rows
    y = jnp.dot(y.astype(bf16), t3_ref[...], preferred_element_type=f32)
    feat = _leaky(y + b3_ref[...])                                # (bn, 150) NCHW flatten

    # MLP head (f32) + softmax(dim=1).
    h = _leaky(jnp.dot(feat, wl1_ref[...], preferred_element_type=f32) + bl1_ref[...])
    h = _leaky(jnp.dot(h, wl2_ref[...], preferred_element_type=f32) + bl2_ref[...])
    logits = jnp.dot(h, wl3_ref[...], preferred_element_type=f32) + bl3_ref[...]
    m = jnp.max(logits, axis=1, keepdims=True)
    e = jnp.exp(logits - m)
    out_ref[...] = e / jnp.sum(e, axis=1, keepdims=True)


def policy_net_forward(x, params, block_n=8):
    """x: (N, H, W, C_IN) float32, NHWC (the convention the torch module expects)."""
    (w1, b1, w2, b2, w3, b3, wl1, bl1, wl2, bl2, wl3, bl3) = params
    n = x.shape[0]
    bf16 = jnp.bfloat16

    # --- one-time weight prep (cheap glue on tiny weight tensors) -----------
    t1 = _conv_operator(w1, H, W, 'SAME').astype(bf16)                  # (80,  500)
    t2 = _conv_operator(w2, H, W, 'SAME').astype(bf16)                  # (500, 500)
    t3 = _conv_operator(w3, H, W, 'VALID', out_nchw=True).astype(bf16)  # (500, 150)
    b1r = jnp.tile(b1, (1, H * W))                                      # (1, 500) NHWC
    b2r = jnp.tile(b2, (1, H * W))                                      # (1, 500) NHWC
    b3r = jnp.repeat(b3, HO * WO, axis=1)                               # (1, 150) NCHW

    x2d = x.reshape(n, IN_FEAT).astype(jnp.float32)                     # free reshape

    # --- batch grid: block_n rows per step, parallel across steps / TCs -----
    n_pad = pl.cdiv(n, block_n) * block_n
    if n_pad != n:
        x2d = jnp.pad(x2d, ((0, n_pad - n), (0, 0)))
    grid = (n_pad // block_n,)

    consts = (t1, b1r, t2, b2r, t3, b3r, wl1, bl1, wl2, bl2, wl3, bl3)
    const_specs = [pl.BlockSpec(c.shape, lambda i: (0, 0)) for c in consts]

    out = pl.pallas_call(
        _policy_kernel,
        out_shape=jax.ShapeDtypeStruct((n_pad, ACTIONS), jnp.float32),
        grid=grid,
        in_specs=[pl.BlockSpec((block_n, IN_FEAT), lambda i: (i, 0))] + const_specs,
        out_specs=pl.BlockSpec((block_n, ACTIONS), lambda i: (i, 0)),
        compiler_params=pltpu.CompilerParams(dimension_semantics=("parallel",)),
    )(x2d, *consts)
    return out[:n]


# ----------------------------------------------------------------------------
# Deterministic synthetic parameters (shapes from PolicyNet.__init__, CNN branch).
# Conv weights stored HWIO; linear weights stored (in, out) = torch weight.T.
# ----------------------------------------------------------------------------
def init_params(key):
    ks = jax.random.split(key, 12)
    s = 0.1
    w1 = s * jax.random.normal(ks[0], (5, 5, C_IN, C1), jnp.float32)
    b1 = s * jax.random.normal(ks[1], (1, C1), jnp.float32)
    w2 = s * jax.random.normal(ks[2], (3, 3, C1, C1), jnp.float32)
    b2 = s * jax.random.normal(ks[3], (1, C1), jnp.float32)
    w3 = s * jax.random.normal(ks[4], (3, 3, C1, C1), jnp.float32)
    b3 = s * jax.random.normal(ks[5], (1, C1), jnp.float32)
    wl1 = s * jax.random.normal(ks[6], (FLAT, HIDDEN), jnp.float32)
    bl1 = s * jax.random.normal(ks[7], (1, HIDDEN), jnp.float32)
    wl2 = s * jax.random.normal(ks[8], (HIDDEN, HIDDEN), jnp.float32)
    bl2 = s * jax.random.normal(ks[9], (1, HIDDEN), jnp.float32)
    wl3 = s * jax.random.normal(ks[10], (HIDDEN, ACTIONS), jnp.float32)
    bl3 = s * jax.random.normal(ks[11], (1, ACTIONS), jnp.float32)
    return (w1, b1, w2, b2, w3, b3, wl1, bl1, wl2, bl2, wl3, bl3)


def reference_forward(x, params):
    """Pure-JAX replica of the PyTorch forward (for correctness checking)."""
    (w1, b1, w2, b2, w3, b3, wl1, bl1, wl2, bl2, wl3, bl3) = params
    dn = ('NCHW', 'HWIO', 'NCHW')
    prec = lax.Precision.HIGHEST
    y = jnp.transpose(x, (0, 3, 1, 2))                      # x.permute(0, 3, 1, 2)
    y = lax.conv_general_dilated(y, w1, (1, 1), 'SAME',
                                 dimension_numbers=dn, precision=prec)
    y = _leaky(y + b1.reshape(1, C1, 1, 1))
    y = lax.conv_general_dilated(y, w2, (1, 1), 'SAME',
                                 dimension_numbers=dn, precision=prec)
    y = _leaky(y + b2.reshape(1, C1, 1, 1))
    y = lax.conv_general_dilated(y, w3, (1, 1), 'VALID',
                                 dimension_numbers=dn, precision=prec)
    y = _leaky(y + b3.reshape(1, C1, 1, 1))
    y = y.reshape(y.shape[0], -1)                           # nn.Flatten() (NCHW order)
    y = _leaky(jnp.dot(y, wl1, precision=prec) + bl1)
    y = _leaky(jnp.dot(y, wl2, precision=prec) + bl2)
    logits = jnp.dot(y, wl3, precision=prec) + bl3
    return jax.nn.softmax(logits, axis=1)                   # F.softmax(..., dim=1)


if __name__ == "__main__":
    N = 2
    key = jax.random.PRNGKey(0)
    kx, kp = jax.random.split(key)
    x = jax.random.normal(kx, (N, H, W, C_IN), jnp.float32)  # NHWC input
    params = init_params(kp)

    probs = jax.jit(policy_net_forward)(x, params)
    probs = jax.block_until_ready(probs)

    ref = reference_forward(x, params)
    assert probs.shape == (N, ACTIONS)
    np.testing.assert_allclose(np.asarray(jnp.sum(probs, axis=1)),
                               np.ones(N, np.float32), atol=5e-3)
    np.testing.assert_allclose(np.asarray(probs), np.asarray(ref),
                               rtol=5e-2, atol=5e-3)
    print("KERNEL_OK")
</pallas_src>

<mosaic_0001>
module attributes {stable_mosaic.version = 11 : i64} {
  func.func @_policy_kernel(%arg0: i32, %arg1: memref<8x80xf32, #tpu.memory_space<vmem>>, %arg2: memref<80x500xbf16, #tpu.memory_space<vmem>>, %arg3: memref<1x500xf32, #tpu.memory_space<vmem>>, %arg4: memref<500x500xbf16, #tpu.memory_space<vmem>>, %arg5: memref<1x500xf32, #tpu.memory_space<vmem>>, %arg6: memref<500x150xbf16, #tpu.memory_space<vmem>>, %arg7: memref<1x150xf32, #tpu.memory_space<vmem>>, %arg8: memref<150x32xf32, #tpu.memory_space<vmem>>, %arg9: memref<1x32xf32, #tpu.memory_space<vmem>>, %arg10: memref<32x32xf32, #tpu.memory_space<vmem>>, %arg11: memref<1x32xf32, #tpu.memory_space<vmem>>, %arg12: memref<32x6xf32, #tpu.memory_space<vmem>>, %arg13: memref<1x6xf32, #tpu.memory_space<vmem>>, %arg14: memref<8x6xf32, #tpu.memory_space<vmem>>) attributes {dimension_semantics = [#tpu.dimension_semantics<parallel>], iteration_bounds = array<i64: 1>, scalar_prefetch = 0 : i64, scratch_operands = 0 : i64, tpu.core_type = #tpu.core_type<tc>, window_params = [{transform_indices = @transform_0, window_bounds = array<i64: 8, 80>}, {pipeline_mode = #tpu.pipeline_mode<synchronous>, transform_indices = @transform_1, window_bounds = array<i64: 80, 500>}, {pipeline_mode = #tpu.pipeline_mode<synchronous>, transform_indices = @transform_2, window_bounds = array<i64: 1, 500>}, {pipeline_mode = #tpu.pipeline_mode<synchronous>, transform_indices = @transform_3, window_bounds = array<i64: 500, 500>}, {pipeline_mode = #tpu.pipeline_mode<synchronous>, transform_indices = @transform_4, window_bounds = array<i64: 1, 500>}, {pipeline_mode = #tpu.pipeline_mode<synchronous>, transform_indices = @transform_5, window_bounds = array<i64: 500, 150>}, {pipeline_mode = #tpu.pipeline_mode<synchronous>, transform_indices = @transform_6, window_bounds = array<i64: 1, 150>}, {pipeline_mode = #tpu.pipeline_mode<synchronous>, transform_indices = @transform_7, window_bounds = array<i64: 150, 32>}, {pipeline_mode = #tpu.pipeline_mode<synchronous>, transform_indices = @transform_8, window_bounds = array<i64: 1, 32>}, {pipeline_mode = #tpu.pipeline_mode<synchronous>, transform_indices = @transform_9, window_bounds = array<i64: 32, 32>}, {pipeline_mode = #tpu.pipeline_mode<synchronous>, transform_indices = @transform_10, window_bounds = array<i64: 1, 32>}, {pipeline_mode = #tpu.pipeline_mode<synchronous>, transform_indices = @transform_11, window_bounds = array<i64: 32, 6>}, {pipeline_mode = #tpu.pipeline_mode<synchronous>, transform_indices = @transform_12, window_bounds = array<i64: 1, 6>}, {transform_indices = @transform_13, window_bounds = array<i64: 8, 6>}]} {
    %c0 = arith.constant 0 : index
    %c0_0 = arith.constant 0 : index
    %0 = vector.load %arg1[%c0, %c0_0] : memref<8x80xf32, #tpu.memory_space<vmem>>, vector<8x80xf32>
    %1 = arith.truncf %0 : vector<8x80xf32> to vector<8x80xbf16>
    %c0_1 = arith.constant 0 : index
    %c0_2 = arith.constant 0 : index
    %2 = vector.load %arg2[%c0_1, %c0_2] : memref<80x500xbf16, #tpu.memory_space<vmem>>, vector<80x500xbf16>
    %cst = arith.constant dense<0.000000e+00> : vector<8x500xf32>
    %3 = tpu.matmul %1, %2, %cst {dimension_numbers = #tpu.dot_dimension_numbers<[1], [0], [0], [1], [0, 0, 1, 1], [], []>} : vector<8x80xbf16>, vector<80x500xbf16>, vector<8x500xf32> -> vector<8x500xf32>
    %c0_3 = arith.constant 0 : index
    %c0_4 = arith.constant 0 : index
    %4 = vector.load %arg3[%c0_3, %c0_4] : memref<1x500xf32, #tpu.memory_space<vmem>>, vector<1x500xf32>
    %5 = vector.broadcast %4 : vector<1x500xf32> to vector<8x500xf32>
    %6 = arith.addf %3, %5 : vector<8x500xf32>
    %cst_5 = arith.constant 0.000000e+00 : f32
    %7 = vector.broadcast %cst_5 : f32 to vector<8x500xf32>
    %8 = arith.cmpf oge, %6, %7 : vector<8x500xf32>
    %cst_6 = arith.constant 0.00999999977 : f32
    %9 = vector.broadcast %cst_6 : f32 to vector<8x500xf32>
    %10 = arith.mulf %9, %6 : vector<8x500xf32>
    %11 = arith.select %8, %6, %10 : vector<8x500xi1>, vector<8x500xf32>
    %12 = arith.truncf %11 : vector<8x500xf32> to vector<8x500xbf16>
    %c0_7 = arith.constant 0 : index
    %c0_8 = arith.constant 0 : index
    %13 = vector.load %arg4[%c0_7, %c0_8] : memref<500x500xbf16, #tpu.memory_space<vmem>>, vector<500x500xbf16>
    %cst_9 = arith.constant dense<0.000000e+00> : vector<8x500xf32>
    %14 = tpu.matmul %12, %13, %cst_9 {dimension_numbers = #tpu.dot_dimension_numbers<[1], [0], [0], [1], [0, 0, 1, 1], [], []>} : vector<8x500xbf16>, vector<500x500xbf16>, vector<8x500xf32> -> vector<8x500xf32>
    %c0_10 = arith.constant 0 : index
    %c0_11 = arith.constant 0 : index
    %15 = vector.load %arg5[%c0_10, %c0_11] : memref<1x500xf32, #tpu.memory_space<vmem>>, vector<1x500xf32>
    %16 = vector.broadcast %15 : vector<1x500xf32> to vector<8x500xf32>
    %17 = arith.addf %14, %16 : vector<8x500xf32>
    %cst_12 = arith.constant 0.000000e+00 : f32
    %18 = vector.broadcast %cst_12 : f32 to vector<8x500xf32>
    %19 = arith.cmpf oge, %17, %18 : vector<8x500xf32>
    %cst_13 = arith.constant 0.00999999977 : f32
    %20 = vector.broadcast %cst_13 : f32 to vector<8x500xf32>
    %21 = arith.mulf %20, %17 : vector<8x500xf32>
    %22 = arith.select %19, %17, %21 : vector<8x500xi1>, vector<8x500xf32>
    %23 = arith.truncf %22 : vector<8x500xf32> to vector<8x500xbf16>
    %c0_14 = arith.constant 0 : index
    %c0_15 = arith.constant 0 : index
    %24 = vector.load %arg6[%c0_14, %c0_15] : memref<500x150xbf16, #tpu.memory_space<vmem>>, vector<500x150xbf16>
    %cst_16 = arith.constant dense<0.000000e+00> : vector<8x150xf32>
    %25 = tpu.matmul %23, %24, %cst_16 {dimension_numbers = #tpu.dot_dimension_numbers<[1], [0], [0], [1], [0, 0, 1, 1], [], []>} : vector<8x500xbf16>, vector<500x150xbf16>, vector<8x150xf32> -> vector<8x150xf32>
    %c0_17 = arith.constant 0 : index
    %c0_18 = arith.constant 0 : index
    %26 = vector.load %arg7[%c0_17, %c0_18] : memref<1x150xf32, #tpu.memory_space<vmem>>, vector<1x150xf32>
    %27 = vector.broadcast %26 : vector<1x150xf32> to vector<8x150xf32>
    %28 = arith.addf %25, %27 : vector<8x150xf32>
    %cst_19 = arith.constant 0.000000e+00 : f32
    %29 = vector.broadcast %cst_19 : f32 to vector<8x150xf32>
    %30 = arith.cmpf oge, %28, %29 : vector<8x150xf32>
    %cst_20 = arith.constant 0.00999999977 : f32
    %31 = vector.broadcast %cst_20 : f32 to vector<8x150xf32>
    %32 = arith.mulf %31, %28 : vector<8x150xf32>
    %33 = arith.select %30, %28, %32 : vector<8x150xi1>, vector<8x150xf32>
    %c0_21 = arith.constant 0 : index
    %c0_22 = arith.constant 0 : index
    %34 = vector.load %arg8[%c0_21, %c0_22] : memref<150x32xf32, #tpu.memory_space<vmem>>, vector<150x32xf32>
    %cst_23 = arith.constant dense<0.000000e+00> : vector<8x32xf32>
    %35 = tpu.matmul %33, %34, %cst_23 {dimension_numbers = #tpu.dot_dimension_numbers<[1], [0], [0], [1], [0, 0, 1, 1], [], []>} : vector<8x150xf32>, vector<150x32xf32>, vector<8x32xf32> -> vector<8x32xf32>
    %c0_24 = arith.constant 0 : index
    %c0_25 = arith.constant 0 : index
    %36 = vector.load %arg9[%c0_24, %c0_25] : memref<1x32xf32, #tpu.memory_space<vmem>>, vector<1x32xf32>
    %37 = vector.broadcast %36 : vector<1x32xf32> to vector<8x32xf32>
    %38 = arith.addf %35, %37 : vector<8x32xf32>
    %cst_26 = arith.constant 0.000000e+00 : f32
    %39 = vector.broadcast %cst_26 : f32 to vector<8x32xf32>
    %40 = arith.cmpf oge, %38, %39 : vector<8x32xf32>
    %cst_27 = arith.constant 0.00999999977 : f32
    %41 = vector.broadcast %cst_27 : f32 to vector<8x32xf32>
    %42 = arith.mulf %41, %38 : vector<8x32xf32>
    %43 = arith.select %40, %38, %42 : vector<8x32xi1>, vector<8x32xf32>
    %c0_28 = arith.constant 0 : index
    %c0_29 = arith.constant 0 : index
    %44 = vector.load %arg10[%c0_28, %c0_29] : memref<32x32xf32, #tpu.memory_space<vmem>>, vector<32x32xf32>
    %cst_30 = arith.constant dense<0.000000e+00> : vector<8x32xf32>
    %45 = tpu.matmul %43, %44, %cst_30 {dimension_numbers = #tpu.dot_dimension_numbers<[1], [0], [0], [1], [0, 0, 1, 1], [], []>} : vector<8x32xf32>, vector<32x32xf32>, vector<8x32xf32> -> vector<8x32xf32>
    %c0_31 = arith.constant 0 : index
    %c0_32 = arith.constant 0 : index
    %46 = vector.load %arg11[%c0_31, %c0_32] : memref<1x32xf32, #tpu.memory_space<vmem>>, vector<1x32xf32>
    %47 = vector.broadcast %46 : vector<1x32xf32> to vector<8x32xf32>
    %48 = arith.addf %45, %47 : vector<8x32xf32>
    %cst_33 = arith.constant 0.000000e+00 : f32
    %49 = vector.broadcast %cst_33 : f32 to vector<8x32xf32>
    %50 = arith.cmpf oge, %48, %49 : vector<8x32xf32>
    %cst_34 = arith.constant 0.00999999977 : f32
    %51 = vector.broadcast %cst_34 : f32 to vector<8x32xf32>
    %52 = arith.mulf %51, %48 : vector<8x32xf32>
    %53 = arith.select %50, %48, %52 : vector<8x32xi1>, vector<8x32xf32>
    %c0_35 = arith.constant 0 : index
    %c0_36 = arith.constant 0 : index
    %54 = vector.load %arg12[%c0_35, %c0_36] : memref<32x6xf32, #tpu.memory_space<vmem>>, vector<32x6xf32>
    %cst_37 = arith.constant dense<0.000000e+00> : vector<8x6xf32>
    %55 = tpu.matmul %53, %54, %cst_37 {dimension_numbers = #tpu.dot_dimension_numbers<[1], [0], [0], [1], [0, 0, 1, 1], [], []>} : vector<8x32xf32>, vector<32x6xf32>, vector<8x6xf32> -> vector<8x6xf32>
    %c0_38 = arith.constant 0 : index
    %c0_39 = arith.constant 0 : index
    %56 = vector.load %arg13[%c0_38, %c0_39] : memref<1x6xf32, #tpu.memory_space<vmem>>, vector<1x6xf32>
    %57 = vector.broadcast %56 : vector<1x6xf32> to vector<8x6xf32>
    %58 = arith.addf %55, %57 : vector<8x6xf32>
    %cst_40 = arith.constant dense<0xFF800000> : vector<8xf32>
    %59 = vector.multi_reduction <maximumf>, %58, %cst_40 [1] : vector<8x6xf32> to vector<8xf32>
    %60 = vector.shape_cast %59 : vector<8xf32> to vector<8x1xf32>
    %61 = vector.broadcast %60 : vector<8x1xf32> to vector<8x6xf32>
    %62 = arith.subf %58, %61 : vector<8x6xf32>
    %63 = math.exp %62 : vector<8x6xf32>
    %cst_41 = arith.constant dense<0.000000e+00> : vector<8xf32>
    %64 = vector.multi_reduction <add>, %63, %cst_41 [1] : vector<8x6xf32> to vector<8xf32>
    %65 = vector.shape_cast %64 : vector<8xf32> to vector<8x1xf32>
    %66 = vector.broadcast %65 : vector<8x1xf32> to vector<8x6xf32>
    %67 = arith.divf %63, %66 : vector<8x6xf32>
    %c0_42 = arith.constant 0 : index
    %c0_43 = arith.constant 0 : index
    %68 = vector.load %arg14[%c0_42, %c0_43] : memref<8x6xf32, #tpu.memory_space<vmem>>, vector<8x6xf32>
    tpu.vector_store %arg14[%c0_42, %c0_43], %67 {strides = array<i32>} : memref<8x6xf32, #tpu.memory_space<vmem>>, vector<8x6xf32>,
    return
  }
  func.func @transform_0(%arg0: i32) -> (i32, i32) {
    %c0_i32 = arith.constant 0 : i32
    %c0_i32_0 = arith.constant 0 : i32
    return %arg0, %c0_i32 : i32, i32
  }
  func.func @transform_1(%arg0: i32) -> (i32, i32) {
    %c0_i32 = arith.constant 0 : i32
    %c0_i32_0 = arith.constant 0 : i32
    %c0_i32_1 = arith.constant 0 : i32
    return %c0_i32, %c0_i32_0 : i32, i32
  }
  func.func @transform_2(%arg0: i32) -> (i32, i32) {
    %c0_i32 = arith.constant 0 : i32
    %c0_i32_0 = arith.constant 0 : i32
    %c0_i32_1 = arith.constant 0 : i32
    return %c0_i32, %c0_i32_0 : i32, i32
  }
  func.func @transform_3(%arg0: i32) -> (i32, i32) {
    %c0_i32 = arith.constant 0 : i32
    %c0_i32_0 = arith.constant 0 : i32
    %c0_i32_1 = arith.constant 0 : i32
    return %c0_i32, %c0_i32_0 : i32, i32
  }
  func.func @transform_4(%arg0: i32) -> (i32, i32) {
    %c0_i32 = arith.constant 0 : i32
    %c0_i32_0 = arith.constant 0 : i32
    %c0_i32_1 = arith.constant 0 : i32
    return %c0_i32, %c0_i32_0 : i32, i32
  }
  func.func @transform_5(%arg0: i32) -> (i32, i32) {
    %c0_i32 = arith.constant 0 : i32
    %c0_i32_0 = arith.constant 0 : i32
    %c0_i32_1 = arith.constant 0 : i32
    return %c0_i32, %c0_i32_0 : i32, i32
  }
  func.func @transform_6(%arg0: i32) -> (i32, i32) {
    %c0_i32 = arith.constant 0 : i32
    %c0_i32_0 = arith.constant 0 : i32
    %c0_i32_1 = arith.constant 0 : i32
    return %c0_i32, %c0_i32_0 : i32, i32
  }
  func.func @transform_7(%arg0: i32) -> (i32, i32) {
    %c0_i32 = arith.constant 0 : i32
    %c0_i32_0 = arith.constant 0 : i32
    %c0_i32_1 = arith.constant 0 : i32
    return %c0_i32, %c0_i32_0 : i32, i32
  }
  func.func @transform_8(%arg0: i32) -> (i32, i32) {
    %c0_i32 = arith.constant 0 : i32
    %c0_i32_0 = arith.constant 0 : i32
    %c0_i32_1 = arith.constant 0 : i32
    return %c0_i32, %c0_i32_0 : i32, i32
  }
  func.func @transform_9(%arg0: i32) -> (i32, i32) {
    %c0_i32 = arith.constant 0 : i32
    %c0_i32_0 = arith.constant 0 : i32
    %c0_i32_1 = arith.constant 0 : i32
    return %c0_i32, %c0_i32_0 : i32, i32
  }
  func.func @transform_10(%arg0: i32) -> (i32, i32) {
    %c0_i32 = arith.constant 0 : i32
    %c0_i32_0 = arith.constant 0 : i32
    %c0_i32_1 = arith.constant 0 : i32
    return %c0_i32, %c0_i32_0 : i32, i32
  }
  func.func @transform_11(%arg0: i32) -> (i32, i32) {
    %c0_i32 = arith.constant 0 : i32
    %c0_i32_0 = arith.constant 0 : i32
    %c0_i32_1 = arith.constant 0 : i32
    return %c0_i32, %c0_i32_0 : i32, i32
  }
  func.func @transform_12(%arg0: i32) -> (i32, i32) {
    %c0_i32 = arith.constant 0 : i32
    %c0_i32_0 = arith.constant 0 : i32
    %c0_i32_1 = arith.constant 0 : i32
    return %c0_i32, %c0_i32_0 : i32, i32
  }
  func.func @transform_13(%arg0: i32) -> (i32, i32) {
    %c0_i32 = arith.constant 0 : i32
    %c0_i32_0 = arith.constant 0 : i32
    return %arg0, %c0_i32 : i32, i32
  }
}

</mosaic_0001>

<llo_original>
// kernel: reverse
$region0: #{reverse}
  #allocation0 [shape = 's32[1]{0}', space=sflag, size = 0x4, scoped, tag = 'scoped memory for reverse']
  %s0 = inlined_call_operand.vmem [shape: f32[5,5,4,25], index: 0, kind: input, shape index: {}]
  %s1 = inlined_call_operand.vmem [shape: f32[5,5,4,25], index: 1, kind: output, shape index: {}]
  %s2 = scalar_lea.vmem %s0, 96
  %v3 = vld [vmem:[%s2] sm:$0xf]
  %4 = vst [vmem:[%s1] sm:$0xf] %v3
  %s5 = scalar_lea.vmem %s0, 76
  %v6 = vld [vmem:[%s5] sm:$0xf]
  %s7 = scalar_lea.vmem %s1, 20
  %8 = vst [vmem:[%s7] sm:$0xf] %v6
  %s9 = scalar_lea.vmem %s0, 56
  %v10 = vld [vmem:[%s9] sm:$0xf]
  %s11 = scalar_lea.vmem %s1, 40
  %12 = vst [vmem:[%s11] sm:$0xf] %v10
  %s13 = scalar_lea.vmem %s0, 36
  %v14 = vld [vmem:[%s13] sm:$0xf]
  %s15 = scalar_lea.vmem %s1, 60
  %16 = vst [vmem:[%s15] sm:$0xf] %v14
  %s17 = scalar_lea.vmem %s0, 16
  %v18 = vld [vmem:[%s17] sm:$0xf]
  %s19 = scalar_lea.vmem %s1, 80
  %20 = vst [vmem:[%s19] sm:$0xf] %v18
  %s21 = scalar_lea.vmem %s0, 92
  %v22 = vld [vmem:[%s21] sm:$0xf]
  %s23 = scalar_lea.vmem %s1, 4
  %24 = vst [vmem:[%s23] sm:$0xf] %v22
  %s25 = scalar_lea.vmem %s0, 72
  %v26 = vld [vmem:[%s25] sm:$0xf]
  %s27 = scalar_lea.vmem %s1, 24
  %28 = vst [vmem:[%s27] sm:$0xf] %v26
  %s29 = scalar_lea.vmem %s0, 52
  %v30 = vld [vmem:[%s29] sm:$0xf]
  %s31 = scalar_lea.vmem %s1, 44
  %32 = vst [vmem:[%s31] sm:$0xf] %v30
  %s33 = scalar_lea.vmem %s0, 32
  %v34 = vld [vmem:[%s33] sm:$0xf]
  %s35 = scalar_lea.vmem %s1, 64
  %36 = vst [vmem:[%s35] sm:$0xf] %v34
  %s37 = scalar_lea.vmem %s0, 12
  %v38 = vld [vmem:[%s37] sm:$0xf]
  %s39 = scalar_lea.vmem %s1, 84
  %40 = vst [vmem:[%s39] sm:$0xf] %v38
  %s41 = scalar_lea.vmem %s0, 88
  %v42 = vld [vmem:[%s41] sm:$0xf]
  %s43 = scalar_lea.vmem %s1, 8
  %44 = vst [vmem:[%s43] sm:$0xf] %v42
  %s45 = scalar_lea.vmem %s0, 68
  %v46 = vld [vmem:[%s45] sm:$0xf]
  %s47 = scalar_lea.vmem %s1, 28
  %48 = vst [vmem:[%s47] sm:$0xf] %v46
  %s49 = scalar_lea.vmem %s0, 48
  %v50 = vld [vmem:[%s49] sm:$0xf]
  %s51 = scalar_lea.vmem %s1, 48
  %52 = vst [vmem:[%s51] sm:$0xf] %v50
  %s53 = scalar_lea.vmem %s0, 28
  %v54 = vld [vmem:[%s53] sm:$0xf]
  %s55 = scalar_lea.vmem %s1, 68
  %56 = vst [vmem:[%s55] sm:$0xf] %v54
  %s57 = scalar_lea.vmem %s0, 8
  %v58 = vld [vmem:[%s57] sm:$0xf]
  %s59 = scalar_lea.vmem %s1, 88
  %60 = vst [vmem:[%s59] sm:$0xf] %v58
  %s61 = scalar_lea.vmem %s0, 84
  %v62 = vld [vmem:[%s61] sm:$0xf]
  %s63 = scalar_lea.vmem %s1, 12
  %64 = vst [vmem:[%s63] sm:$0xf] %v62
  %s65 = scalar_lea.vmem %s0, 64
  %v66 = vld [vmem:[%s65] sm:$0xf]
  %s67 = scalar_lea.vmem %s1, 32
  %68 = vst [vmem:[%s67] sm:$0xf] %v66
  %s69 = scalar_lea.vmem %s0, 44
  %v70 = vld [vmem:[%s69] sm:$0xf]
  %s71 = scalar_lea.vmem %s1, 52
  %72 = vst [vmem:[%s71] sm:$0xf] %v70
  %s73 = scalar_lea.vmem %s0, 24
  %v74 = vld [vmem:[%s73] sm:$0xf]
  %s75 = scalar_lea.vmem %s1, 72
  %76 = vst [vmem:[%s75] sm:$0xf] %v74
  %s77 = scalar_lea.vmem %s0, 4
  %v78 = vld [vmem:[%s77] sm:$0xf]
  %s79 = scalar_lea.vmem %s1, 92
  %80 = vst [vmem:[%s79] sm:$0xf] %v78
  %s81 = scalar_lea.vmem %s0, 80
  %v82 = vld [vmem:[%s81] sm:$0xf]
  %s83 = scalar_lea.vmem %s1, 16
  %84 = vst [vmem:[%s83] sm:$0xf] %v82
  %s85 = scalar_lea.vmem %s0, 60
  %v86 = vld [vmem:[%s85] sm:$0xf]
  %s87 = scalar_lea.vmem %s1, 36
  %88 = vst [vmem:[%s87] sm:$0xf] %v86
  %s89 = scalar_lea.vmem %s0, 40
  %v90 = vld [vmem:[%s89] sm:$0xf]
  %s91 = scalar_lea.vmem %s1, 56
  %92 = vst [vmem:[%s91] sm:$0xf] %v90
  %s93 = scalar_lea.vmem %s0, 20
  %v94 = vld [vmem:[%s93] sm:$0xf]
  %s95 = scalar_lea.vmem %s1, 76
  %96 = vst [vmem:[%s95] sm:$0xf] %v94
  %v97 = vld [vmem:[%s0] sm:$0xf]
  %s98 = scalar_lea.vmem %s1, 96
  %99 = vst [vmem:[%s98] sm:$0xf] %v97

// kernel: policy_net_forward.1
$region0: #{policy_net_forward.1}
  #allocation0 [shape = 'u32[]', space=smem, size = 0x4, offset = 0x4, fixed_abs, tag = 'smem constant byte address 0x4 - core index']
  #allocation1 [shape = 'u32[144,128]{1,0:T(1,128)}', space=vmem, size = 0x12000, scoped, tag = 'internal scratch']
  %s0 = inlined_call_operand.vmem [shape: f32[8,80], index: 0, kind: input, shape index: {}]
  %s1 = inlined_call_operand.vmem [shape: bf16[80,500], index: 1, kind: input, shape index: {}]
  %s2 = inlined_call_operand.vmem [shape: f32[1,500], index: 2, kind: input, shape index: {}]
  %s3 = inlined_call_operand.vmem [shape: bf16[500,500], index: 3, kind: input, shape index: {}]
  %s4 = inlined_call_operand.vmem [shape: f32[1,500], index: 4, kind: input, shape index: {}]
  %s5 = inlined_call_operand.vmem [shape: bf16[500,150], index: 5, kind: input, shape index: {}]
  %s6 = inlined_call_operand.vmem [shape: f32[1,150], index: 6, kind: input, shape index: {}]
  %s7 = inlined_call_operand.vmem [shape: f32[150,32], index: 7, kind: input, shape index: {}]
  %s8 = inlined_call_operand.vmem [shape: f32[1,32], index: 8, kind: input, shape index: {}]
  %s9 = inlined_call_operand.vmem [shape: f32[32,32], index: 9, kind: input, shape index: {}]
  %s10 = inlined_call_operand.vmem [shape: f32[1,32], index: 10, kind: input, shape index: {}]
  %s11 = inlined_call_operand.vmem [shape: f32[32,6], index: 11, kind: input, shape index: {}]
  %s12 = inlined_call_operand.vmem [shape: f32[1,6], index: 12, kind: input, shape index: {}]
  %s13 = inlined_call_operand.vmem [shape: f32[8,6], index: 13, kind: output, shape index: {}]
  %s14 = sld [smem:[#allocation0]]
  $region62: #{policy_net_forward.1} parent=0
    _
  %s16 = ssub.s32 1, %s14
  %s17 = scalar_select 0, %s16, %s14
  // Predicated region
  $region2: #{policy_net_forward.1} parent=0 // pred_check
    _
  $region3: #{policy_net_forward.1} parent=0 // pred_check_branch
    %19 = sbr.rel (0) target = $region5
  $region4: #{policy_net_forward.1} parent=0 // pred_region
    _
  $region5: #{policy_net_forward.1} parent=0 // pred_fallthru
    _
  // Predicated region
  $region6: #{policy_net_forward.1} parent=0 // pred_check
    _
  $region7: #{policy_net_forward.1} parent=0 // pred_check_branch
    %21 = sbr.rel (0) target = $region9
  $region8: #{policy_net_forward.1} parent=0 // pred_region
    _
  $region9: #{policy_net_forward.1} parent=0 // pred_fallthru
    _
  // Predicated region
  $region10: #{policy_net_forward.1} parent=0 // pred_check
    _
  $region11: #{policy_net_forward.1} parent=0 // pred_check_branch
    %23 = sbr.rel (0) target = $region13
  $region12: #{policy_net_forward.1} parent=0 // pred_region
    _
  $region13: #{policy_net_forward.1} parent=0 // pred_fallthru
    _
  // Predicated region
  $region14: #{policy_net_forward.1} parent=0 // pred_check
    _
  $region15: #{policy_net_forward.1} parent=0 // pred_check_branch
    %25 = sbr.rel (0) target = $region17
  $region16: #{policy_net_forward.1} parent=0 // pred_region
    _
  $region17: #{policy_net_forward.1} parent=0 // pred_fallthru
    _
  // Predicated region
  $region18: #{policy_net_forward.1} parent=0 // pred_check
    _
  $region19: #{policy_net_forward.1} parent=0 // pred_check_branch
    %27 = sbr.rel (0) target = $region21
  $region20: #{policy_net_forward.1} parent=0 // pred_region
    _
  $region21: #{policy_net_forward.1} parent=0 // pred_fallthru
    _
  // Predicated region
  $region22: #{policy_net_forward.1} parent=0 // pred_check
    _
  $region23: #{policy_net_forward.1} parent=0 // pred_check_branch
    %29 = sbr.rel (0) target = $region25
  $region24: #{policy_net_forward.1} parent=0 // pred_region
    _
  $region25: #{policy_net_forward.1} parent=0 // pred_fallthru
    _
  // Predicated region
  $region26: #{policy_net_forward.1} parent=0 // pred_check
    _
  $region27: #{policy_net_forward.1} parent=0 // pred_check_branch
    %31 = sbr.rel (0) target = $region29
  $region28: #{policy_net_forward.1} parent=0 // pred_region
    _
  $region29: #{policy_net_forward.1} parent=0 // pred_fallthru
    _
  // Predicated region
  $region30: #{policy_net_forward.1} parent=0 // pred_check
    _
  $region31: #{policy_net_forward.1} parent=0 // pred_check_branch
    %33 = sbr.rel (0) target = $region33
  $region32: #{policy_net_forward.1} parent=0 // pred_region
    _
  $region33: #{policy_net_forward.1} parent=0 // pred_fallthru
    _
  // Predicated region
  $region34: #{policy_net_forward.1} parent=0 // pred_check
    _
  $region35: #{policy_net_forward.1} parent=0 // pred_check_branch
    %35 = sbr.rel (0) target = $region37
  $region36: #{policy_net_forward.1} parent=0 // pred_region
    _
  $region37: #{policy_net_forward.1} parent=0 // pred_fallthru
    _
  // Predicated region
  $region38: #{policy_net_forward.1} parent=0 // pred_check
    _
  $region39: #{policy_net_forward.1} parent=0 // pred_check_branch
    %37 = sbr.rel (0) target = $region41
  $region40: #{policy_net_forward.1} parent=0 // pred_region
    _
  $region41: #{policy_net_forward.1} parent=0 // pred_fallthru
    _
  // Predicated region
  $region42: #{policy_net_forward.1} parent=0 // pred_check
    _
  $region43: #{policy_net_forward.1} parent=0 // pred_check_branch
    %39 = sbr.rel (0) target = $region45
  $region44: #{policy_net_forward.1} parent=0 // pred_region
    _
  $region45: #{policy_net_forward.1} parent=0 // pred_fallthru
    _
  // Predicated region
  $region46: #{policy_net_forward.1} parent=0 // pred_check
    _
  $region47: #{policy_net_forward.1} parent=0 // pred_check_branch
    %41 = sbr.rel (0) target = $region49
  $region48: #{policy_net_forward.1} parent=0 // pred_region
    _
  $region49: #{policy_net_forward.1} parent=0 // pred_fallthru
    _
  // Predicated region
  $region50: #{policy_net_forward.1} parent=0 // pred_check
    _
  $region51: #{policy_net_forward.1} parent=0 // pred_check_branch
    %43 = sbr.rel (0) target = $region53
  $region52: #{policy_net_forward.1} parent=0 // pred_region
    _
  $region53: #{policy_net_forward.1} parent=0 // pred_fallthru
    _
  %v45 = vld [vmem:[%s0] sm:$0xff]
  %v46 = vpack.c.bf16 %v45, %v45
  %v47 = vld [vmem:[%s1] sm:$0xff]
  %v48 = vld [vmem:[%s1 + $0x8] sm:$0xff]
  %v49 = vld [vmem:[%s1 + $0x10] sm:$0xff]
  %v50 = vld [vmem:[%s1 + $0x18] sm:$0xff]
  %v51 = vld [vmem:[%s1 + $0x20] sm:$0xff]
  %v52 = vld [vmem:[%s1 + $0x28] sm:$0xff]
  %v53 = vld [vmem:[%s1 + $0x30] sm:$0xff]
  %v54 = vld [vmem:[%s1 + $0x38] sm:$0xff]
  %v55 = vld [vmem:[%s1 + $0x40] sm:$0xff]
  %v56 = vld [vmem:[%s1 + $0x48] sm:$0xff]
  %v57 = vld [vmem:[%s1 + $0x50] sm:$0xff]
  %v58 = vld [vmem:[%s1 + $0x58] sm:$0xff]
  %v59 = vld [vmem:[%s1 + $0x60] sm:$0xff]
  %v60 = vld [vmem:[%s1 + $0x68] sm:$0xff]
  %v61 = vld [vmem:[%s1 + $0x70] sm:$0xff]
  %v62 = vld [vmem:[%s1 + $0x78] sm:$0xff]
  %v63 = vld [vmem:[%s1 + $0x80] sm:$0xff]
  %v64 = vld [vmem:[%s1 + $0x88] sm:$0xff]
  %v65 = vld [vmem:[%s1 + $0x90] sm:$0xff]
  %v66 = vld [vmem:[%s1 + $0x98] sm:$0xff]
  %v67 = vld [vmem:[%s2] sm:$0xf]
  %v69 = vlaneseq
  %v70 = vshrl.u32 %v69, 7
  %v71 = vsub.s32 0, %v70
  %v72 = vrot.slane %v67, %v71
  %v73 = vlaneseq
  %v74 = vshrl.u32 %v73, 7
  %v75 = vsub.s32 1, %v74
  %v76 = vrot.slane %v67, %v75
  %v77 = vlaneseq
  %v78 = vshrl.u32 %v77, 7
  %v79 = vsub.s32 2, %v78
  %v80 = vrot.slane %v67, %v79
  %v81 = vlaneseq
  %v82 = vshrl.u32 %v81, 7
  %v83 = vsub.s32 3, %v82
  %v84 = vrot.slane %v67, %v83
  %v109 = vunpack.c.l.b16 %v47
  %v110 = vunpack.c.h.b16 %v47
  %v111 = vunpack.c.l.b16 %v48
  %v112 = vunpack.c.h.b16 %v48
  %v113 = vunpack.c.l.b16 %v49
  %v114 = vunpack.c.h.b16 %v49
  %v115 = vunpack.c.l.b16 %v50
  %v116 = vunpack.c.h.b16 %v50
  %v117 = vunpack.c.l.b16 %v51
  %v118 = vunpack.c.h.b16 %v51
  %v119 = vunpack.c.l.b16 %v52
  %v120 = vunpack.c.h.b16 %v52
  %v121 = vunpack.c.l.b16 %v53
  %v122 = vunpack.c.h.b16 %v53
  %v123 = vunpack.c.l.b16 %v54
  %v124 = vunpack.c.h.b16 %v54
  %v125 = vunpack.c.l.b16 %v55
  %v126 = vunpack.c.h.b16 %v55
  %v127 = vunpack.c.l.b16 %v56
  %v128 = vunpack.c.h.b16 %v56
  %v129 = vunpack.c.l.b16 %v57
  %v130 = vunpack.c.h.b16 %v57
  %v131 = vunpack.c.l.b16 %v58
  %v132 = vunpack.c.h.b16 %v58
  %v133 = vunpack.c.l.b16 %v59
  %v134 = vunpack.c.h.b16 %v59
  %v135 = vunpack.c.l.b16 %v60
  %v136 = vunpack.c.h.b16 %v60
  %v137 = vunpack.c.l.b16 %v61
  %v138 = vunpack.c.h.b16 %v61
  %v139 = vunpack.c.l.b16 %v62
  %v140 = vunpack.c.h.b16 %v62
  %v141 = vunpack.c.l.b16 %v63
  %v142 = vunpack.c.h.b16 %v63
  %v143 = vunpack.c.l.b16 %v64
  %v144 = vunpack.c.h.b16 %v64
  %v145 = vunpack.c.l.b16 %v65
  %v146 = vunpack.c.h.b16 %v65
  %v147 = vunpack.c.l.b16 %v66
  %v148 = vunpack.c.h.b16 %v66
  %v149 = vpack.c.b16 %v113, %v109
  %v150 = vpack.c.b16 %v114, %v110
  %v151 = vpack.c.b16 %v115, %v111
  %v152 = vpack.c.b16 %v116, %v112
  %v153 = vpack.c.b16 %v121, %v117
  %v154 = vpack.c.b16 %v122, %v118
  %v155 = vpack.c.b16 %v123, %v119
  %v156 = vpack.c.b16 %v124, %v120
  %v157 = vpack.c.b16 %v129, %v125
  %v158 = vpack.c.b16 %v130, %v126
  %v159 = vpack.c.b16 %v131, %v127
  %v160 = vpack.c.b16 %v132, %v128
  %v161 = vpack.c.b16 %v137, %v133
  %v162 = vpack.c.b16 %v138, %v134
  %v163 = vpack.c.b16 %v139, %v135
  %v164 = vpack.c.b16 %v140, %v136
  %v165 = vpack.c.b16 %v145, %v141
  %v166 = vpack.c.b16 %v146, %v142
  %v167 = vpack.c.b16 %v147, %v143
  %v168 = vpack.c.b16 %v148, %v144
  %vm189 = vcmask 654336
  %v191 = vsel %vm189, %v46, 0
  %193 = vmatprep.subr.bf16.mxu0 %v150
  %194 = vmatpush1.bf16.msra.mxu0 %v149
  %195 = vmatprep.subr.bf16.mxu0 %v154
  %196 = vmatpush1.bf16.msra.mxu0 %v153
  %197 = vmatprep.subr.bf16.mxu0 %v158
  %198 = vmatpush1.bf16.msra.mxu0 %v157
  %199 = vmatprep.subr.bf16.mxu0 %v162
  %200 = vmatpush1.bf16.msra.mxu0 %v161
  %201 = vmatprep.subr.bf16.mxu0 %v166
  %202 = vmatpush1.bf16.msra.mxu0 %v165
  %203 = vmatprep.subr.bf16.mxu0 0
  %204 = vmatpush1.bf16.msra.mxu0 0
  %205 = vmatprep.subr.bf16.mxu0 0
  %206 = vmatpush1.bf16.msra.mxu0 0
  %207 = vmatprep.subr.bf16.mxu0 0
  %208 = vmatpush1.bf16.msra.mxu0 0
  %209 = vmatprep.subr.bf16.mxu0 0
  %210 = vmatpush1.bf16.msra.mxu0 0
  %211 = vmatprep.subr.bf16.mxu0 0
  %212 = vmatpush1.bf16.msra.mxu0 0
  %213 = vmatprep.subr.bf16.mxu0 0
  %214 = vmatpush1.bf16.msra.mxu0 0
  %215 = vmatprep.subr.bf16.mxu0 0
  %216 = vmatpush1.bf16.msra.mxu0 0
  %217 = vmatprep.subr.bf16.mxu0 0
  %218 = vmatpush1.bf16.msra.mxu0 0
  %219 = vmatprep.subr.bf16.mxu0 0
  %220 = vmatpush1.bf16.msra.mxu0 0
  %221 = vmatprep.subr.bf16.mxu0 0
  %222 = vmatpush1.bf16.msra.mxu0 0
  %223 = vmatprep.subr.bf16.mxu0 0
  %224 = vmatpush1.bf16.msra.mxu0 0
  %225 = vmatprep.mubr.bf16.mxu0 0
  %226 = vmatmul.mubr.bf16.gmra.mrb[0].mxu0 %v191
  %v227 = vpop.f32.mrb[0].mxu0
  %v228 = vadd.f32 %v72, %v227
  %v229 = vpop.f32.mrb[0].mxu0
  %v230 = vadd.f32 %v76, %v229
  %v231 = vpop.f32.mrb[0].mxu0
  %v232 = vpop.f32.mrb[0].mxu0
  %233 = vdwg.mxu0
  %234 = vmatprep.subr.bf16.mxu0 %v152
  %235 = vmatpush1.bf16.msra.mxu0 %v151
  %236 = vmatprep.subr.bf16.mxu0 %v156
  %237 = vmatpush1.bf16.msra.mxu0 %v155
  %238 = vmatprep.subr.bf16.mxu0 %v160
  %239 = vmatpush1.bf16.msra.mxu0 %v159
  %240 = vmatprep.subr.bf16.mxu0 %v164
  %241 = vmatpush1.bf16.msra.mxu0 %v163
  %242 = vmatprep.subr.bf16.mxu0 %v168
  %243 = vmatpush1.bf16.msra.mxu0 %v167
  %244 = vmatprep.subr.bf16.mxu0 0
  %245 = vmatpush1.bf16.msra.mxu0 0
  %246 = vmatprep.subr.bf16.mxu0 0
  %247 = vmatpush1.bf16.msra.mxu0 0
  %248 = vmatprep.subr.bf16.mxu0 0
  %249 = vmatpush1.bf16.msra.mxu0 0
  %250 = vmatprep.subr.bf16.mxu0 0
  %251 = vmatpush1.bf16.msra.mxu0 0
  %252 = vmatprep.subr.bf16.mxu0 0
  %253 = vmatpush1.bf16.msra.mxu0 0
  %254 = vmatprep.subr.bf16.mxu0 0
  %255 = vmatpush1.bf16.msra.mxu0 0
  %256 = vmatprep.subr.bf16.mxu0 0
  %257 = vmatpush1.bf16.msra.mxu0 0
  %258 = vmatprep.subr.bf16.mxu0 0
  %259 = vmatpush1.bf16.msra.mxu0 0
  %260 = vmatprep.subr.bf16.mxu0 0
  %261 = vmatpush1.bf16.msra.mxu0 0
  %262 = vmatprep.subr.bf16.mxu0 0
  %263 = vmatpush1.bf16.msra.mxu0 0
  %264 = vmatprep.subr.bf16.mxu0 0
  %265 = vmatpush1.bf16.msra.mxu0 0
  %266 = vmatprep.mubr.bf16.mxu0 0
  %267 = vmatmul.mubr.bf16.gmra.mrb[0].mxu0 %v191
  %v268 = vpop.f32.mrb[0].mxu0
  %v269 = vadd.f32 %v80, %v268
  %v270 = vpop.f32.mrb[0].mxu0
  %v271 = vadd.f32 %v84, %v270
  %v272 = vpop.f32.mrb[0].mxu0
  %v273 = vpop.f32.mrb[0].mxu0
  %274 = vdwg.mxu0
  %vm275 = vcmp.ge.f32.partialorder %v228, 0.0
  %vm276 = vcmp.ge.f32.partialorder %v230, 0.0
  %vm277 = vcmp.ge.f32.partialorder %v269, 0.0
  %vm278 = vcmp.ge.f32.partialorder %v271, 0.0
  %v279 = vmul.f32 %v228, 0.01
  %v280 = vmul.f32 %v230, 0.01
  %v281 = vmul.f32 %v269, 0.01
  %v282 = vmul.f32 %v271, 0.01
  %v283 = vsel %vm275, %v228, %v279
  %v284 = vsel %vm276, %v230, %v280
  %v285 = vsel %vm277, %v269, %v281
  %v286 = vsel %vm278, %v271, %v282
  %v287 = vpack.c.bf16 %v283, %v283
  %v288 = vpack.c.bf16 %v284, %v284
  %v289 = vpack.c.bf16 %v285, %v285
  %v290 = vpack.c.bf16 %v286, %v286
  %v291 = vld [vmem:[%s3] sm:$0xff]
  %v292 = vld [vmem:[%s3 + $0x8] sm:$0xff]
  %v293 = vld [vmem:[%s3 + $0x10] sm:$0xff]
  %v294 = vld [vmem:[%s3 + $0x18] sm:$0xff]
  %v295 = vld [vmem:[%s3 + $0x20] sm:$0xff]
  %v296 = vld [vmem:[%s3 + $0x28] sm:$0xff]
  %v297 = vld [vmem:[%s3 + $0x30] sm:$0xff]
  %v298 = vld [vmem:[%s3 + $0x38] sm:$0xff]
  %v299 = vld [vmem:[%s3 + $0x40] sm:$0xff]
  %v300 = vld [vmem:[%s3 + $0x48] sm:$0xff]
  %v301 = vld [vmem:[%s3 + $0x50] sm:$0xff]
  %v302 = vld [vmem:[%s3 + $0x58] sm:$0xff]
  %v303 = vld [vmem:[%s3 + $0x60] sm:$0xff]
  %v304 = vld [vmem:[%s3 + $0x68] sm:$0xff]
  %v305 = vld [vmem:[%s3 + $0x70] sm:$0xff]
  %v306 = vld [vmem:[%s3 + $0x78] sm:$0xff]
  %v307 = vld [vmem:[%s3 + $0x80] sm:$0xff]
  %v308 = vld [vmem:[%s3 + $0x88] sm:$0xff]
  %v309 = vld [vmem:[%s3 + $0x90] sm:$0xff]
  %v310 = vld [vmem:[%s3 + $0x98] sm:$0xff]
  %v311 = vld [vmem:[%s3 + $0xa0] sm:$0xff]
  %v312 = vld [vmem:[%s3 + $0xa8] sm:$0xff]
  %v313 = vld [vmem:[%s3 + $0xb0] sm:$0xff]
  %v314 = vld [vmem:[%s3 + $0xb8] sm:$0xff]
  %v315 = vld [vmem:[%s3 + $0xc0] sm:$0xff]
  %v316 = vld [vmem:[%s3 + $0xc8] sm:$0xff]
  %v317 = vld [vmem:[%s3 + $0xd0] sm:$0xff]
  %v318 = vld [vmem:[%s3 + $0xd8] sm:$0xff]
  %v319 = vld [vmem:[%s3 + $0xe0] sm:$0xff]
  %v320 = vld [vmem:[%s3 + $0xe8] sm:$0xff]
  %v321 = vld [vmem:[%s3 + $0xf0] sm:$0xff]
  %v322 = vld [vmem:[%s3 + $0xf8] sm:$0xff]
  %v323 = vld [vmem:[%s3 + $0x100] sm:$0xff]
  %v324 = vld [vmem:[%s3 + $0x108] sm:$0xff]
  %v325 = vld [vmem:[%s3 + $0x110] sm:$0xff]
  %v326 = vld [vmem:[%s3 + $0x118] sm:$0xff]
  %v327 = vld [vmem:[%s3 + $0x120] sm:$0xff]
  %v328 = vld [vmem:[%s3 + $0x128] sm:$0xff]
  %v329 = vld [vmem:[%s3 + $0x130] sm:$0xff]
  %v330 = vld [vmem:[%s3 + $0x138] sm:$0xff]
  %v331 = vld [vmem:[%s3 + $0x140] sm:$0xff]
  %v332 = vld [vmem:[%s3 + $0x148] sm:$0xff]
  %v333 = vld [vmem:[%s3 + $0x150] sm:$0xff]
  %v334 = vld [vmem:[%s3 + $0x158] sm:$0xff]
  %v335 = vld [vmem:[%s3 + $0x160] sm:$0xff]
  %v336 = vld [vmem:[%s3 + $0x168] sm:$0xff]
  %v337 = vld [vmem:[%s3 + $0x170] sm:$0xff]
  %v338 = vld [vmem:[%s3 + $0x178] sm:$0xff]
  %v339 = vld [vmem:[%s3 + $0x180] sm:$0xff]
  %v340 = vld [vmem:[%s3 + $0x188] sm:$0xff]
  %v341 = vld [vmem:[%s3 + $0x190] sm:$0xff]
  %v342 = vld [vmem:[%s3 + $0x198] sm:$0xff]
  %v343 = vld [vmem:[%s3 + $0x1a0] sm:$0xff]
  %v344 = vld [vmem:[%s3 + $0x1a8] sm:$0xff]
  %v345 = vld [vmem:[%s3 + $0x1b0] sm:$0xff]
  %v346 = vld [vmem:[%s3 + $0x1b8] sm:$0xff]
  %v347 = vld [vmem:[%s3 + $0x1c0] sm:$0xff]
  %v348 = vld [vmem:[%s3 + $0x1c8] sm:$0xff]
  %v349 = vld [vmem:[%s3 + $0x1d0] sm:$0xff]
  %v350 = vld [vmem:[%s3 + $0x1d8] sm:$0xff]
  %v351 = vld [vmem:[%s3 + $0x1e0] sm:$0xff]
  %v352 = vld [vmem:[%s3 + $0x1e8] sm:$0xff]
  %v353 = vld [vmem:[%s3 + $0x1f0] sm:$0xff]
  %v354 = vld [vmem:[%s3 + $0x1f8] sm:$0xff]
  %v355 = vld [vmem:[%s3 + $0x200] sm:$0xff]
  %v356 = vld [vmem:[%s3 + $0x208] sm:$0xff]
  %v357 = vld [vmem:[%s3 + $0x210] sm:$0xff]
  %v358 = vld [vmem:[%s3 + $0x218] sm:$0xff]
  %v359 = vld [vmem:[%s3 + $0x220] sm:$0xff]
  %v360 = vld [vmem:[%s3 + $0x228] sm:$0xff]
  %v361 = vld [vmem:[%s3 + $0x230] sm:$0xff]
  %v362 = vld [vmem:[%s3 + $0x238] sm:$0xff]
  %v363 = vld [vmem:[%s3 + $0x240] sm:$0xff]
  %v364 = vld [vmem:[%s3 + $0x248] sm:$0xff]
  %v365 = vld [vmem:[%s3 + $0x250] sm:$0xff]
  %v366 = vld [vmem:[%s3 + $0x258] sm:$0xff]
  %v367 = vld [vmem:[%s3 + $0x260] sm:$0xff]
  %v368 = vld [vmem:[%s3 + $0x268] sm:$0xff]
  %v369 = vld [vmem:[%s3 + $0x270] sm:$0xff]
  %v370 = vld [vmem:[%s3 + $0x278] sm:$0xff]
  %v371 = vld [vmem:[%s3 + $0x280] sm:$0xff]
  %v372 = vld [vmem:[%s3 + $0x288] sm:$0xff]
  %v373 = vld [vmem:[%s3 + $0x290] sm:$0xff]
  %v374 = vld [vmem:[%s3 + $0x298] sm:$0xff]
  %v375 = vld [vmem:[%s3 + $0x2a0] sm:$0xff]
  %v376 = vld [vmem:[%s3 + $0x2a8] sm:$0xff]
  %v377 = vld [vmem:[%s3 + $0x2b0] sm:$0xff]
  %v378 = vld [vmem:[%s3 + $0x2b8] sm:$0xff]
  %v379 = vld [vmem:[%s3 + $0x2c0] sm:$0xff]
  %v380 = vld [vmem:[%s3 + $0x2c8] sm:$0xff]
  %v381 = vld [vmem:[%s3 + $0x2d0] sm:$0xff]
  %v382 = vld [vmem:[%s3 + $0x2d8] sm:$0xff]
  %v383 = vld [vmem:[%s3 + $0x2e0] sm:$0xff]
  %v384 = vld [vmem:[%s3 + $0x2e8] sm:$0xff]
  %v385 = vld [vmem:[%s3 + $0x2f0] sm:$0xff]
  %v386 = vld [vmem:[%s3 + $0x2f8] sm:$0xff]
  %v387 = vld [vmem:[%s3 + $0x300] sm:$0xff]
  %v388 = vld [vmem:[%s3 + $0x308] sm:$0xff]
  %v389 = vld [vmem:[%s3 + $0x310] sm:$0xff]
  %v390 = vld [vmem:[%s3 + $0x318] sm:$0xff]
  %v391 = vld [vmem:[%s3 + $0x320] sm:$0xff]
  %v392 = vld [vmem:[%s3 + $0x328] sm:$0xff]
  %v393 = vld [vmem:[%s3 + $0x330] sm:$0xff]
  %v394 = vld [vmem:[%s3 + $0x338] sm:$0xff]
  %v395 = vld [vmem:[%s3 + $0x340] sm:$0xff]
  %v396 = vld [vmem:[%s3 + $0x348] sm:$0xff]
  %v397 = vld [vmem:[%s3 + $0x350] sm:$0xff]
  %v398 = vld [vmem:[%s3 + $0x358] sm:$0xff]
  %v399 = vld [vmem:[%s3 + $0x360] sm:$0xff]
  %v400 = vld [vmem:[%s3 + $0x368] sm:$0xff]
  %v401 = vld [vmem:[%s3 + $0x370] sm:$0xff]
  %v402 = vld [vmem:[%s3 + $0x378] sm:$0xff]
  %v403 = vld [vmem:[%s3 + $0x380] sm:$0xff]
  %v404 = vld [vmem:[%s3 + $0x388] sm:$0xff]
  %v405 = vld [vmem:[%s3 + $0x390] sm:$0xff]
  %v406 = vld [vmem:[%s3 + $0x398] sm:$0xff]
  %v407 = vld [vmem:[%s3 + $0x3a0] sm:$0xff]
  %v408 = vld [vmem:[%s3 + $0x3a8] sm:$0xff]
  %v409 = vld [vmem:[%s3 + $0x3b0] sm:$0xff]
  %v410 = vld [vmem:[%s3 + $0x3b8] sm:$0xff]
  %v411 = vld [vmem:[%s3 + $0x3c0] sm:$0xff]
  %v412 = vld [vmem:[%s3 + $0x3c8] sm:$0xff]
  %v413 = vld [vmem:[%s3 + $0x3d0] sm:$0xff]
  %v414 = vld [vmem:[%s3 + $0x3d8] sm:$0xff]
  %v415 = vld [vmem:[%s3 + $0x3e0] sm:$0x33]
  %v416 = vld [vmem:[%s3 + $0x3e8] sm:$0x33]
  %v417 = vld [vmem:[%s4] sm:$0xf]
  %v419 = vlaneseq
  %v420 = vshrl.u32 %v419, 7
  %v421 = vsub.s32 0, %v420
  %v422 = vrot.slane %v417, %v421
  %v423 = vlaneseq
  %v424 = vshrl.u32 %v423, 7
  %v425 = vsub.s32 1, %v424
  %v426 = vrot.slane %v417, %v425
  %v427 = vlaneseq
  %v428 = vshrl.u32 %v427, 7
  %v429 = vsub.s32 2, %v428
  %v430 = vrot.slane %v417, %v429
  %v431 = vlaneseq
  %v432 = vshrl.u32 %v431, 7
  %v433 = vsub.s32 3, %v432
  %v434 = vrot.slane %v417, %v433
  %v565 = vunpack.c.l.b16 %v291
  %v566 = vunpack.c.h.b16 %v291
  %v567 = vunpack.c.l.b16 %v292
  %v568 = vunpack.c.h.b16 %v292
  %v569 = vunpack.c.l.b16 %v293
  %v570 = vunpack.c.h.b16 %v293
  %v571 = vunpack.c.l.b16 %v294
  %v572 = vunpack.c.h.b16 %v294
  %v573 = vunpack.c.l.b16 %v295
  %v574 = vunpack.c.h.b16 %v295
  %v575 = vunpack.c.l.b16 %v296
  %v576 = vunpack.c.h.b16 %v296
  %v577 = vunpack.c.l.b16 %v297
  %v578 = vunpack.c.h.b16 %v297
  %v579 = vunpack.c.l.b16 %v298
  %v580 = vunpack.c.h.b16 %v298
  %v581 = vunpack.c.l.b16 %v299
  %v582 = vunpack.c.h.b16 %v299
  %v583 = vunpack.c.l.b16 %v300
  %v584 = vunpack.c.h.b16 %v300
  %v585 = vunpack.c.l.b16 %v301
  %v586 = vunpack.c.h.b16 %v301
  %v587 = vunpack.c.l.b16 %v302
  %v588 = vunpack.c.h.b16 %v302
  %v589 = vunpack.c.l.b16 %v303
  %v590 = vunpack.c.h.b16 %v303
  %v591 = vunpack.c.l.b16 %v304
  %v592 = vunpack.c.h.b16 %v304
  %v593 = vunpack.c.l.b16 %v305
  %v594 = vunpack.c.h.b16 %v305
  %v595 = vunpack.c.l.b16 %v306
  %v596 = vunpack.c.h.b16 %v306
  %v597 = vunpack.c.l.b16 %v307
  %v598 = vunpack.c.h.b16 %v307
  %v599 = vunpack.c.l.b16 %v308
  %v600 = vunpack.c.h.b16 %v308
  %v601 = vunpack.c.l.b16 %v309
  %v602 = vunpack.c.h.b16 %v309
  %v603 = vunpack.c.l.b16 %v310
  %v604 = vunpack.c.h.b16 %v310
  %v605 = vunpack.c.l.b16 %v311
  %v606 = vunpack.c.h.b16 %v311
  %v607 = vunpack.c.l.b16 %v312
  %v608 = vunpack.c.h.b16 %v312
  %v609 = vunpack.c.l.b16 %v313
  %v610 = vunpack.c.h.b16 %v313
  %v611 = vunpack.c.l.b16 %v314
  %v612 = vunpack.c.h.b16 %v314
  %v613 = vunpack.c.l.b16 %v315
  %v614 = vunpack.c.h.b16 %v315
  %v615 = vunpack.c.l.b16 %v316
  %v616 = vunpack.c.h.b16 %v316
  %v617 = vunpack.c.l.b16 %v317
  %v618 = vunpack.c.h.b16 %v317
  %v619 = vunpack.c.l.b16 %v318
  %v620 = vunpack.c.h.b16 %v318
  %v621 = vunpack.c.l.b16 %v319
  %v622 = vunpack.c.h.b16 %v319
  %v623 = vunpack.c.l.b16 %v320
  %v624 = vunpack.c.h.b16 %v320
  %v625 = vunpack.c.l.b16 %v321
  %v626 = vunpack.c.h.b16 %v321
  %v627 = vunpack.c.l.b16 %v322
  %v628 = vunpack.c.h.b16 %v322
  %v629 = vunpack.c.l.b16 %v323
  %v630 = vunpack.c.h.b16 %v323
  %v631 = vunpack.c.l.b16 %v324
  %v632 = vunpack.c.h.b16 %v324
  %v633 = vunpack.c.l.b16 %v325
  %v634 = vunpack.c.h.b16 %v325
  %v635 = vunpack.c.l.b16 %v326
  %v636 = vunpack.c.h.b16 %v326
  %v637 = vunpack.c.l.b16 %v327
  %v638 = vunpack.c.h.b16 %v327
  %v639 = vunpack.c.l.b16 %v328
  %v640 = vunpack.c.h.b16 %v328
  %v641 = vunpack.c.l.b16 %v329
  %v642 = vunpack.c.h.b16 %v329
  %v643 = vunpack.c.l.b16 %v330
  %v644 = vunpack.c.h.b16 %v330
  %v645 = vunpack.c.l.b16 %v331
  %v646 = vunpack.c.h.b16 %v331
  %v647 = vunpack.c.l.b16 %v332
  %v648 = vunpack.c.h.b16 %v332
  %v649 = vunpack.c.l.b16 %v333
  %v650 = vunpack.c.h.b16 %v333
  %v651 = vunpack.c.l.b16 %v334
  %v652 = vunpack.c.h.b16 %v334
  %v653 = vunpack.c.l.b16 %v335
  %v654 = vunpack.c.h.b16 %v335
  %v655 = vunpack.c.l.b16 %v336
  %v656 = vunpack.c.h.b16 %v336
  %v657 = vunpack.c.l.b16 %v337
  %v658 = vunpack.c.h.b16 %v337
  %v659 = vunpack.c.l.b16 %v338
  %v660 = vunpack.c.h.b16 %v338
  %v661 = vunpack.c.l.b16 %v339
  %v662 = vunpack.c.h.b16 %v339
  %v663 = vunpack.c.l.b16 %v340
  %v664 = vunpack.c.h.b16 %v340
  %v665 = vunpack.c.l.b16 %v341
  %v666 = vunpack.c.h.b16 %v341
  %v667 = vunpack.c.l.b16 %v342
  %v668 = vunpack.c.h.b16 %v342
  %v669 = vunpack.c.l.b16 %v343
  %v670 = vunpack.c.h.b16 %v343
  %v671 = vunpack.c.l.b16 %v344
  %v672 = vunpack.c.h.b16 %v344
  %v673 = vunpack.c.l.b16 %v345
  %v674 = vunpack.c.h.b16 %v345
  %v675 = vunpack.c.l.b16 %v346
  %v676 = vunpack.c.h.b16 %v346
  %v677 = vunpack.c.l.b16 %v347
  %v678 = vunpack.c.h.b16 %v347
  %v679 = vunpack.c.l.b16 %v348
  %v680 = vunpack.c.h.b16 %v348
  %v681 = vunpack.c.l.b16 %v349
  %v682 = vunpack.c.h.b16 %v349
  %v683 = vunpack.c.l.b16 %v350
  %v684 = vunpack.c.h.b16 %v350
  %v685 = vunpack.c.l.b16 %v351
  %v686 = vunpack.c.h.b16 %v351
  %v687 = vunpack.c.l.b16 %v352
  %v688 = vunpack.c.h.b16 %v352
  %v689 = vunpack.c.l.b16 %v353
  %v690 = vunpack.c.h.b16 %v353
  %v691 = vunpack.c.l.b16 %v354
  %v692 = vunpack.c.h.b16 %v354
  %v693 = vunpack.c.l.b16 %v355
  %v694 = vunpack.c.h.b16 %v355
  %v695 = vunpack.c.l.b16 %v356
  %v696 = vunpack.c.h.b16 %v356
  %v697 = vunpack.c.l.b16 %v357
  %v698 = vunpack.c.h.b16 %v357
  %v699 = vunpack.c.l.b16 %v358
  %v700 = vunpack.c.h.b16 %v358
  %v701 = vunpack.c.l.b16 %v359
  %v702 = vunpack.c.h.b16 %v359
  %v703 = vunpack.c.l.b16 %v360
  %v704 = vunpack.c.h.b16 %v360
  %v705 = vunpack.c.l.b16 %v361
  %v706 = vunpack.c.h.b16 %v361
  %v707 = vunpack.c.l.b16 %v362
  %v708 = vunpack.c.h.b16 %v362
  %v709 = vunpack.c.l.b16 %v363
  %v710 = vunpack.c.h.b16 %v363
  %v711 = vunpack.c.l.b16 %v364
  %v712 = vunpack.c.h.b16 %v364
  %v713 = vunpack.c.l.b16 %v365
  %v714 = vunpack.c.h.b16 %v365
  %v715 = vunpack.c.l.b16 %v366
  %v716 = vunpack.c.h.b16 %v366
  %v717 = vunpack.c.l.b16 %v367
  %v718 = vunpack.c.h.b16 %v367
  %v719 = vunpack.c.l.b16 %v368
  %v720 = vunpack.c.h.b16 %v368
  %v721 = vunpack.c.l.b16 %v369
  %v722 = vunpack.c.h.b16 %v369
  %v723 = vunpack.c.l.b16 %v370
  %v724 = vunpack.c.h.b16 %v370
  %v725 = vunpack.c.l.b16 %v371
  %v726 = vunpack.c.h.b16 %v371
  %v727 = vunpack.c.l.b16 %v372
  %v728 = vunpack.c.h.b16 %v372
  %v729 = vunpack.c.l.b16 %v373
  %v730 = vunpack.c.h.b16 %v373
  %v731 = vunpack.c.l.b16 %v374
  %v732 = vunpack.c.h.b16 %v374
  %v733 = vunpack.c.l.b16 %v375
  %v734 = vunpack.c.h.b16 %v375
  %v735 = vunpack.c.l.b16 %v376
  %v736 = vunpack.c.h.b16 %v376
  %v737 = vunpack.c.l.b16 %v377
  %v738 = vunpack.c.h.b16 %v377
  %v739 = vunpack.c.l.b16 %v378
  %v740 = vunpack.c.h.b16 %v378
  %v741 = vunpack.c.l.b16 %v379
  %v742 = vunpack.c.h.b16 %v379
  %v743 = vunpack.c.l.b16 %v380
  %v744 = vunpack.c.h.b16 %v380
  %v745 = vunpack.c.l.b16 %v381
  %v746 = vunpack.c.h.b16 %v381
  %v747 = vunpack.c.l.b16 %v382
  %v748 = vunpack.c.h.b16 %v382
  %v749 = vunpack.c.l.b16 %v383
  %v750 = vunpack.c.h.b16 %v383
  %v751 = vunpack.c.l.b16 %v384
  %v752 = vunpack.c.h.b16 %v384
  %v753 = vunpack.c.l.b16 %v385
  %v754 = vunpack.c.h.b16 %v385
  %v755 = vunpack.c.l.b16 %v386
  %v756 = vunpack.c.h.b16 %v386
  %v757 = vunpack.c.l.b16 %v387
  %v758 = vunpack.c.h.b16 %v387
  %v759 = vunpack.c.l.b16 %v388
  %v760 = vunpack.c.h.b16 %v388
  %v761 = vunpack.c.l.b16 %v389
  %v762 = vunpack.c.h.b16 %v389
  %v763 = vunpack.c.l.b16 %v390
  %v764 = vunpack.c.h.b16 %v390
  %v765 = vunpack.c.l.b16 %v391
  %v766 = vunpack.c.h.b16 %v391
  %v767 = vunpack.c.l.b16 %v392
  %v768 = vunpack.c.h.b16 %v392
  %v769 = vunpack.c.l.b16 %v393
  %v770 = vunpack.c.h.b16 %v393
  %v771 = vunpack.c.l.b16 %v394
  %v772 = vunpack.c.h.b16 %v394
  %v773 = vunpack.c.l.b16 %v395
  %v774 = vunpack.c.h.b16 %v395
  %v775 = vunpack.c.l.b16 %v396
  %v776 = vunpack.c.h.b16 %v396
  %v777 = vunpack.c.l.b16 %v397
  %v778 = vunpack.c.h.b16 %v397
  %v779 = vunpack.c.l.b16 %v398
  %v780 = vunpack.c.h.b16 %v398
  %v781 = vunpack.c.l.b16 %v399
  %v782 = vunpack.c.h.b16 %v399
  %v783 = vunpack.c.l.b16 %v400
  %v784 = vunpack.c.h.b16 %v400
  %v785 = vunpack.c.l.b16 %v401
  %v786 = vunpack.c.h.b16 %v401
  %v787 = vunpack.c.l.b16 %v402
  %v788 = vunpack.c.h.b16 %v402
  %v789 = vunpack.c.l.b16 %v403
  %v790 = vunpack.c.h.b16 %v403
  %v791 = vunpack.c.l.b16 %v404
  %v792 = vunpack.c.h.b16 %v404
  %v793 = vunpack.c.l.b16 %v405
  %v794 = vunpack.c.h.b16 %v405
  %v795 = vunpack.c.l.b16 %v406
  %v796 = vunpack.c.h.b16 %v406
  %v797 = vunpack.c.l.b16 %v407
  %v798 = vunpack.c.h.b16 %v407
  %v799 = vunpack.c.l.b16 %v408
  %v800 = vunpack.c.h.b16 %v408
  %v801 = vunpack.c.l.b16 %v409
  %v802 = vunpack.c.h.b16 %v409
  %v803 = vunpack.c.l.b16 %v410
  %v804 = vunpack.c.h.b16 %v410
  %v805 = vunpack.c.l.b16 %v411
  %v806 = vunpack.c.h.b16 %v411
  %v807 = vunpack.c.l.b16 %v412
  %v808 = vunpack.c.h.b16 %v412
  %v809 = vunpack.c.l.b16 %v413
  %v810 = vunpack.c.h.b16 %v413
  %v811 = vunpack.c.l.b16 %v414
  %v812 = vunpack.c.h.b16 %v414
  %v813 = vunpack.c.l.b16 %v415
  %v814 = vunpack.c.h.b16 %v415
  %v815 = vunpack.c.l.b16 %v416
  %v816 = vunpack.c.h.b16 %v416
  %v817 = vpack.c.b16 %v569, %v565
  %v818 = vpack.c.b16 %v570, %v566
  %v819 = vpack.c.b16 %v571, %v567
  %v820 = vpack.c.b16 %v572, %v568
  %v821 = vpack.c.b16 %v577, %v573
  %v822 = vpack.c.b16 %v578, %v574
  %v823 = vpack.c.b16 %v579, %v575
  %v824 = vpack.c.b16 %v580, %v576
  %v825 = vpack.c.b16 %v585, %v581
  %v826 = vpack.c.b16 %v586, %v582
  %v827 = vpack.c.b16 %v587, %v583
  %v828 = vpack.c.b16 %v588, %v584
  %v829 = vpack.c.b16 %v593, %v589
  %v830 = vpack.c.b16 %v594, %v590
  %v831 = vpack.c.b16 %v595, %v591
  %v832 = vpack.c.b16 %v596, %v592
  %v833 = vpack.c.b16 %v601, %v597
  %v834 = vpack.c.b16 %v602, %v598
  %v835 = vpack.c.b16 %v603, %v599
  %v836 = vpack.c.b16 %v604, %v600
  %v837 = vpack.c.b16 %v609, %v605
  %v838 = vpack.c.b16 %v610, %v606
  %v839 = vpack.c.b16 %v611, %v607
  %v840 = vpack.c.b16 %v612, %v608
  %v841 = vpack.c.b16 %v617, %v613
  %v842 = vpack.c.b16 %v618, %v614
  %v843 = vpack.c.b16 %v619, %v615
  %v844 = vpack.c.b16 %v620, %v616
  %v845 = vpack.c.b16 %v625, %v621
  %v846 = vpack.c.b16 %v626, %v622
  %v847 = vpack.c.b16 %v627, %v623
  %v848 = vpack.c.b16 %v628, %v624
  %v849 = vpack.c.b16 %v633, %v629
  %v850 = vpack.c.b16 %v634, %v630
  %v851 = vpack.c.b16 %v635, %v631
  %v852 = vpack.c.b16 %v636, %v632
  %v853 = vpack.c.b16 %v641, %v637
  %v854 = vpack.c.b16 %v642, %v638
  %v855 = vpack.c.b16 %v643, %v639
  %v856 = vpack.c.b16 %v644, %v640
  %v857 = vpack.c.b16 %v649, %v645
  %v858 = vpack.c.b16 %v650, %v646
  %v859 = vpack.c.b16 %v651, %v647
  %v860 = vpack.c.b16 %v652, %v648
  %v861 = vpack.c.b16 %v657, %v653
  %v862 = vpack.c.b16 %v658, %v654
  %v863 = vpack.c.b16 %v659, %v655
  %v864 = vpack.c.b16 %v660, %v656
  %v865 = vpack.c.b16 %v665, %v661
  %v866 = vpack.c.b16 %v666, %v662
  %v867 = vpack.c.b16 %v667, %v663
  %v868 = vpack.c.b16 %v668, %v664
  %v869 = vpack.c.b16 %v673, %v669
  %v870 = vpack.c.b16 %v674, %v670
  %v871 = vpack.c.b16 %v675, %v671
  %v872 = vpack.c.b16 %v676, %v672
  %v873 = vpack.c.b16 %v681, %v677
  %v874 = vpack.c.b16 %v682, %v678
  %v875 = vpack.c.b16 %v683, %v679
  %v876 = vpack.c.b16 %v684, %v680
  %v877 = vpack.c.b16 %v689, %v685
  %v878 = vpack.c.b16 %v690, %v686
  %v879 = vpack.c.b16 %v691, %v687
  %v880 = vpack.c.b16 %v692, %v688
  %v881 = vpack.c.b16 %v697, %v693
  %v882 = vpack.c.b16 %v698, %v694
  %v883 = vpack.c.b16 %v699, %v695
  %v884 = vpack.c.b16 %v700, %v696
  %v885 = vpack.c.b16 %v705, %v701
  %v886 = vpack.c.b16 %v706, %v702
  %v887 = vpack.c.b16 %v707, %v703
  %v888 = vpack.c.b16 %v708, %v704
  %v889 = vpack.c.b16 %v713, %v709
  %v890 = vpack.c.b16 %v714, %v710
  %v891 = vpack.c.b16 %v715, %v711
  %v892 = vpack.c.b16 %v716, %v712
  %v893 = vpack.c.b16 %v721, %v717
  %v894 = vpack.c.b16 %v722, %v718
  %v895 = vpack.c.b16 %v723, %v719
  %v896 = vpack.c.b16 %v724, %v720
  %v897 = vpack.c.b16 %v729, %v725
  %v898 = vpack.c.b16 %v730, %v726
  %v899 = vpack.c.b16 %v731, %v727
  %v900 = vpack.c.b16 %v732, %v728
  %v901 = vpack.c.b16 %v737, %v733
  %v902 = vpack.c.b16 %v738, %v734
  %v903 = vpack.c.b16 %v739, %v735
  %v904 = vpack.c.b16 %v740, %v736
  %v905 = vpack.c.b16 %v745, %v741
  %v906 = vpack.c.b16 %v746, %v742
  %v907 = vpack.c.b16 %v747, %v743
  %v908 = vpack.c.b16 %v748, %v744
  %v909 = vpack.c.b16 %v753, %v749
  %v910 = vpack.c.b16 %v754, %v750
  %v911 = vpack.c.b16 %v755, %v751
  %v912 = vpack.c.b16 %v756, %v752
  %v913 = vpack.c.b16 %v761, %v757
  %v914 = vpack.c.b16 %v762, %v758
  %v915 = vpack.c.b16 %v763, %v759
  %v916 = vpack.c.b16 %v764, %v760
  %v917 = vpack.c.b16 %v769, %v765
  %v918 = vpack.c.b16 %v770, %v766
  %v919 = vpack.c.b16 %v771, %v767
  %v920 = vpack.c.b16 %v772, %v768
  %v921 = vpack.c.b16 %v777, %v773
  %v922 = vpack.c.b16 %v778, %v774
  %v923 = vpack.c.b16 %v779, %v775
  %v924 = vpack.c.b16 %v780, %v776
  %v925 = vpack.c.b16 %v785, %v781
  %v926 = vpack.c.b16 %v786, %v782
  %v927 = vpack.c.b16 %v787, %v783
  %v928 = vpack.c.b16 %v788, %v784
  %v929 = vpack.c.b16 %v793, %v789
  %v930 = vpack.c.b16 %v794, %v790
  %v931 = vpack.c.b16 %v795, %v791
  %v932 = vpack.c.b16 %v796, %v792
  %v933 = vpack.c.b16 %v801, %v797
  %v934 = vpack.c.b16 %v802, %v798
  %v935 = vpack.c.b16 %v803, %v799
  %v936 = vpack.c.b16 %v804, %v800
  %v937 = vpack.c.b16 %v809, %v805
  %v938 = vpack.c.b16 %v810, %v806
  %v939 = vpack.c.b16 %v811, %v807
  %v940 = vpack.c.b16 %v812, %v808
  %v941 = vpack.c.b16 %v813, %v813
  %v942 = vpack.c.b16 %v814, %v814
  %v943 = vpack.c.b16 %v815, %v815
  %v944 = vpack.c.b16 %v816, %v816
  %vm1069 = vcmask 949248
  %v1071 = vsel %vm1069, %v290, 0
  %vm1073 = vcmask 1041408
  %v1075 = vsel %vm1073, %v941, 0
  %v1078 = vsel %vm1073, %v942, 0
  %v1081 = vsel %vm1073, %v943, 0
  %v1084 = vsel %vm1073, %v944, 0
  %1086 = vmatprep.subr.bf16.mxu0 %v818
  %1087 = vmatpush1.bf16.msra.mxu0 %v817
  %1088 = vmatprep.subr.bf16.mxu0 %v822
  %1089 = vmatpush1.bf16.msra.mxu0 %v821
  %1090 = vmatprep.subr.bf16.mxu0 %v826
  %1091 = vmatpush1.bf16.msra.mxu0 %v825
  %1092 = vmatprep.subr.bf16.mxu0 %v830
  %1093 = vmatpush1.bf16.msra.mxu0 %v829
  %1094 = vmatprep.subr.bf16.mxu0 %v834
  %1095 = vmatpush1.bf16.msra.mxu0 %v833
  %1096 = vmatprep.subr.bf16.mxu0 %v838
  %1097 = vmatpush1.bf16.msra.mxu0 %v837
  %1098 = vmatprep.subr.bf16.mxu0 %v842
  %1099 = vmatpush1.bf16.msra.mxu0 %v841
  %1100 = vmatprep.subr.bf16.mxu0 %v846
  %1101 = vmatpush1.bf16.msra.mxu0 %v845
  %1102 = vmatprep.subr.bf16.mxu0 %v850
  %1103 = vmatpush1.bf16.msra.mxu0 %v849
  %1104 = vmatprep.subr.bf16.mxu0 %v854
  %1105 = vmatpush1.bf16.msra.mxu0 %v853
  %1106 = vmatprep.subr.bf16.mxu0 %v858
  %1107 = vmatpush1.bf16.msra.mxu0 %v857
  %1108 = vmatprep.subr.bf16.mxu0 %v862
  %1109 = vmatpush1.bf16.msra.mxu0 %v861
  %1110 = vmatprep.subr.bf16.mxu0 %v866
  %1111 = vmatpush1.bf16.msra.mxu0 %v865
  %1112 = vmatprep.subr.bf16.mxu0 %v870
  %1113 = vmatpush1.bf16.msra.mxu0 %v869
  %1114 = vmatprep.subr.bf16.mxu0 %v874
  %1115 = vmatpush1.bf16.msra.mxu0 %v873
  %1116 = vmatprep.subr.bf16.mxu0 %v878
  %1117 = vmatpush1.bf16.msra.mxu0 %v877
  %1118 = vmatprep.mubr.bf16.mxu0 %v288
  %1119 = vmatmul.mubr.bf16.gmra.mrb[0].mxu0 %v287
  %v1120 = vpop.f32.mrb[0].mxu0
  %v1121 = vadd.f32 %v422, %v1120
  %v1122 = vpop.f32.mrb[0].mxu0
  %v1123 = vadd.f32 %v426, %v1122
  %v1124 = vpop.f32.mrb[0].mxu0
  %v1125 = vpop.f32.mrb[0].mxu0
  %1126 = vdwg.mxu0
  %1127 = vmatprep.subr.bf16.mxu0 %v882
  %1128 = vmatpush1.bf16.msra.mxu0 %v881
  %1129 = vmatprep.subr.bf16.mxu0 %v886
  %1130 = vmatpush1.bf16.msra.mxu0 %v885
  %1131 = vmatprep.subr.bf16.mxu0 %v890
  %1132 = vmatpush1.bf16.msra.mxu0 %v889
  %1133 = vmatprep.subr.bf16.mxu0 %v894
  %1134 = vmatpush1.bf16.msra.mxu0 %v893
  %1135 = vmatprep.subr.bf16.mxu0 %v898
  %1136 = vmatpush1.bf16.msra.mxu0 %v897
  %1137 = vmatprep.subr.bf16.mxu0 %v902
  %1138 = vmatpush1.bf16.msra.mxu0 %v901
  %1139 = vmatprep.subr.bf16.mxu0 %v906
  %1140 = vmatpush1.bf16.msra.mxu0 %v905
  %1141 = vmatprep.subr.bf16.mxu0 %v910
  %1142 = vmatpush1.bf16.msra.mxu0 %v909
  %1143 = vmatprep.subr.bf16.mxu0 %v914
  %1144 = vmatpush1.bf16.msra.mxu0 %v913
  %1145 = vmatprep.subr.bf16.mxu0 %v918
  %1146 = vmatpush1.bf16.msra.mxu0 %v917
  %1147 = vmatprep.subr.bf16.mxu0 %v922
  %1148 = vmatpush1.bf16.msra.mxu0 %v921
  %1149 = vmatprep.subr.bf16.mxu0 %v926
  %1150 = vmatpush1.bf16.msra.mxu0 %v925
  %1151 = vmatprep.subr.bf16.mxu0 %v930
  %1152 = vmatpush1.bf16.msra.mxu0 %v929
  %1153 = vmatprep.subr.bf16.mxu0 %v934
  %1154 = vmatpush1.bf16.msra.mxu0 %v933
  %1155 = vmatprep.subr.bf16.mxu0 %v938
  %1156 = vmatpush1.bf16.msra.mxu0 %v937
  %1157 = vmatprep.subr.bf16.mxu0 %v1078
  %1158 = vmatpush1.bf16.msra.mxu0 %v1075
  %1159 = vmatprep.mubr.bf16.mxu0 %v1071
  %1160 = vmatmul.mubr.bf16.gmra.mrb[0].mxu0 %v289
  %v1161 = vpop.f32.mrb[0].mxu0
  %v1162 = vadd.f32 %v1121, %v1161
  %v1163 = vpop.f32.mrb[0].mxu0
  %v1164 = vadd.f32 %v1123, %v1163
  %v1165 = vpop.f32.mrb[0].mxu0
  %v1166 = vpop.f32.mrb[0].mxu0
  %1167 = vdwg.mxu0
  %1168 = vmatprep.subr.bf16.mxu0 %v820
  %1169 = vmatpush1.bf16.msra.mxu0 %v819
  %1170 = vmatprep.subr.bf16.mxu0 %v824
  %1171 = vmatpush1.bf16.msra.mxu0 %v823
  %1172 = vmatprep.subr.bf16.mxu0 %v828
  %1173 = vmatpush1.bf16.msra.mxu0 %v827
  %1174 = vmatprep.subr.bf16.mxu0 %v832
  %1175 = vmatpush1.bf16.msra.mxu0 %v831
  %1176 = vmatprep.subr.bf16.mxu0 %v836
  %1177 = vmatpush1.bf16.msra.mxu0 %v835
  %1178 = vmatprep.subr.bf16.mxu0 %v840
  %1179 = vmatpush1.bf16.msra.mxu0 %v839
  %1180 = vmatprep.subr.bf16.mxu0 %v844
  %1181 = vmatpush1.bf16.msra.mxu0 %v843
  %1182 = vmatprep.subr.bf16.mxu0 %v848
  %1183 = vmatpush1.bf16.msra.mxu0 %v847
  %1184 = vmatprep.subr.bf16.mxu0 %v852
  %1185 = vmatpush1.bf16.msra.mxu0 %v851
  %1186 = vmatprep.subr.bf16.mxu0 %v856
  %1187 = vmatpush1.bf16.msra.mxu0 %v855
  %1188 = vmatprep.subr.bf16.mxu0 %v860
  %1189 = vmatpush1.bf16.msra.mxu0 %v859
  %1190 = vmatprep.subr.bf16.mxu0 %v864
  %1191 = vmatpush1.bf16.msra.mxu0 %v863
  %1192 = vmatprep.subr.bf16.mxu0 %v868
  %1193 = vmatpush1.bf16.msra.mxu0 %v867
  %1194 = vmatprep.subr.bf16.mxu0 %v872
  %1195 = vmatpush1.bf16.msra.mxu0 %v871
  %1196 = vmatprep.subr.bf16.mxu0 %v876
  %1197 = vmatpush1.bf16.msra.mxu0 %v875
  %1198 = vmatprep.subr.bf16.mxu0 %v880
  %1199 = vmatpush1.bf16.msra.mxu0 %v879
  %1200 = vmatprep.mubr.bf16.mxu0 %v288
  %1201 = vmatmul.mubr.bf16.gmra.mrb[0].mxu0 %v287
  %v1202 = vpop.f32.mrb[0].mxu0
  %v1203 = vadd.f32 %v430, %v1202
  %v1204 = vpop.f32.mrb[0].mxu0
  %v1205 = vadd.f32 %v434, %v1204
  %v1206 = vpop.f32.mrb[0].mxu0
  %v1207 = vpop.f32.mrb[0].mxu0
  %1208 = vdwg.mxu0
  %1209 = vmatprep.subr.bf16.mxu0 %v884
  %1210 = vmatpush1.bf16.msra.mxu0 %v883
  %1211 = vmatprep.subr.bf16.mxu0 %v888
  %1212 = vmatpush1.bf16.msra.mxu0 %v887
  %1213 = vmatprep.subr.bf16.mxu0 %v892
  %1214 = vmatpush1.bf16.msra.mxu0 %v891
  %1215 = vmatprep.subr.bf16.mxu0 %v896
  %1216 = vmatpush1.bf16.msra.mxu0 %v895
  %1217 = vmatprep.subr.bf16.mxu0 %v900
  %1218 = vmatpush1.bf16.msra.mxu0 %v899
  %1219 = vmatprep.subr.bf16.mxu0 %v904
  %1220 = vmatpush1.bf16.msra.mxu0 %v903
  %1221 = vmatprep.subr.bf16.mxu0 %v908
  %1222 = vmatpush1.bf16.msra.mxu0 %v907
  %1223 = vmatprep.subr.bf16.mxu0 %v912
  %1224 = vmatpush1.bf16.msra.mxu0 %v911
  %1225 = vmatprep.subr.bf16.mxu0 %v916
  %1226 = vmatpush1.bf16.msra.mxu0 %v915
  %1227 = vmatprep.subr.bf16.mxu0 %v920
  %1228 = vmatpush1.bf16.msra.mxu0 %v919
  %1229 = vmatprep.subr.bf16.mxu0 %v924
  %1230 = vmatpush1.bf16.msra.mxu0 %v923
  %1231 = vmatprep.subr.bf16.mxu0 %v928
  %1232 = vmatpush1.bf16.msra.mxu0 %v927
  %1233 = vmatprep.subr.bf16.mxu0 %v932
  %1234 = vmatpush1.bf16.msra.mxu0 %v931
  %1235 = vmatprep.subr.bf16.mxu0 %v936
  %1236 = vmatpush1.bf16.msra.mxu0 %v935
  %1237 = vmatprep.subr.bf16.mxu0 %v940
  %1238 = vmatpush1.bf16.msra.mxu0 %v939
  %1239 = vmatprep.subr.bf16.mxu0 %v1084
  %1240 = vmatpush1.bf16.msra.mxu0 %v1081
  %1241 = vmatprep.mubr.bf16.mxu0 %v1071
  %1242 = vmatmul.mubr.bf16.gmra.mrb[0].mxu0 %v289
  %v1243 = vpop.f32.mrb[0].mxu0
  %v1244 = vadd.f32 %v1203, %v1243
  %v1245 = vpop.f32.mrb[0].mxu0
  %v1246 = vadd.f32 %v1205, %v1245
  %v1247 = vpop.f32.mrb[0].mxu0
  %v1248 = vpop.f32.mrb[0].mxu0
  %1249 = vdwg.mxu0
  %vm1250 = vcmp.ge.f32.partialorder %v1162, 0.0
  %vm1251 = vcmp.ge.f32.partialorder %v1164, 0.0
  %vm1252 = vcmp.ge.f32.partialorder %v1244, 0.0
  %vm1253 = vcmp.ge.f32.partialorder %v1246, 0.0
  %v1254 = vmul.f32 %v1162, 0.01
  %v1255 = vmul.f32 %v1164, 0.01
  %v1256 = vmul.f32 %v1244, 0.01
  %v1257 = vmul.f32 %v1246, 0.01
  %v1258 = vsel %vm1250, %v1162, %v1254
  %v1259 = vsel %vm1251, %v1164, %v1255
  %v1260 = vsel %vm1252, %v1244, %v1256
  %v1261 = vsel %vm1253, %v1246, %v1257
  %v1262 = vpack.c.bf16 %v1258, %v1258
  %v1263 = vpack.c.bf16 %v1259, %v1259
  %v1264 = vpack.c.bf16 %v1260, %v1260
  %v1265 = vpack.c.bf16 %v1261, %v1261
  %v1266 = vld [vmem:[%s5] sm:$0xff]
  %v1267 = vld [vmem:[%s5 + $0x8] sm:$0xff]
  %v1268 = vld [vmem:[%s5 + $0x10] sm:$0xff]
  %v1269 = vld [vmem:[%s5 + $0x18] sm:$0xff]
  %v1270 = vld [vmem:[%s5 + $0x20] sm:$0xff]
  %v1271 = vld [vmem:[%s5 + $0x28] sm:$0xff]
  %v1272 = vld [vmem:[%s5 + $0x30] sm:$0xff]
  %v1273 = vld [vmem:[%s5 + $0x38] sm:$0xff]
  %v1274 = vld [vmem:[%s5 + $0x40] sm:$0xff]
  %v1275 = vld [vmem:[%s5 + $0x48] sm:$0xff]
  %v1276 = vld [vmem:[%s5 + $0x50] sm:$0xff]
  %v1277 = vld [vmem:[%s5 + $0x58] sm:$0xff]
  %v1278 = vld [vmem:[%s5 + $0x60] sm:$0xff]
  %v1279 = vld [vmem:[%s5 + $0x68] sm:$0xff]
  %v1280 = vld [vmem:[%s5 + $0x70] sm:$0xff]
  %v1281 = vld [vmem:[%s5 + $0x78] sm:$0xff]
  %v1282 = vld [vmem:[%s5 + $0x80] sm:$0xff]
  %v1283 = vld [vmem:[%s5 + $0x88] sm:$0xff]
  %v1284 = vld [vmem:[%s5 + $0x90] sm:$0xff]
  %v1285 = vld [vmem:[%s5 + $0x98] sm:$0xff]
  %v1286 = vld [vmem:[%s5 + $0xa0] sm:$0xff]
  %v1287 = vld [vmem:[%s5 + $0xa8] sm:$0xff]
  %v1288 = vld [vmem:[%s5 + $0xb0] sm:$0xff]
  %v1289 = vld [vmem:[%s5 + $0xb8] sm:$0xff]
  %v1290 = vld [vmem:[%s5 + $0xc0] sm:$0xff]
  %v1291 = vld [vmem:[%s5 + $0xc8] sm:$0xff]
  %v1292 = vld [vmem:[%s5 + $0xd0] sm:$0xff]
  %v1293 = vld [vmem:[%s5 + $0xd8] sm:$0xff]
  %v1294 = vld [vmem:[%s5 + $0xe0] sm:$0xff]
  %v1295 = vld [vmem:[%s5 + $0xe8] sm:$0xff]
  %v1296 = vld [vmem:[%s5 + $0xf0] sm:$0xff]
  %v1297 = vld [vmem:[%s5 + $0xf8] sm:$0xff]
  %v1298 = vld [vmem:[%s5 + $0x100] sm:$0xff]
  %v1299 = vld [vmem:[%s5 + $0x108] sm:$0xff]
  %v1300 = vld [vmem:[%s5 + $0x110] sm:$0xff]
  %v1301 = vld [vmem:[%s5 + $0x118] sm:$0xff]
  %v1302 = vld [vmem:[%s5 + $0x120] sm:$0xff]
  %v1303 = vld [vmem:[%s5 + $0x128] sm:$0xff]
  %v1304 = vld [vmem:[%s5 + $0x130] sm:$0xff]
  %v1305 = vld [vmem:[%s5 + $0x138] sm:$0xff]
  %v1306 = vld [vmem:[%s5 + $0x140] sm:$0xff]
  %v1307 = vld [vmem:[%s5 + $0x148] sm:$0xff]
  %v1308 = vld [vmem:[%s5 + $0x150] sm:$0xff]
  %v1309 = vld [vmem:[%s5 + $0x158] sm:$0xff]
  %v1310 = vld [vmem:[%s5 + $0x160] sm:$0xff]
  %v1311 = vld [vmem:[%s5 + $0x168] sm:$0xff]
  %v1312 = vld [vmem:[%s5 + $0x170] sm:$0xff]
  %v1313 = vld [vmem:[%s5 + $0x178] sm:$0xff]
  %v1314 = vld [vmem:[%s5 + $0x180] sm:$0xff]
  %v1315 = vld [vmem:[%s5 + $0x188] sm:$0xff]
  %v1316 = vld [vmem:[%s5 + $0x190] sm:$0xff]
  %v1317 = vld [vmem:[%s5 + $0x198] sm:$0xff]
  %v1318 = vld [vmem:[%s5 + $0x1a0] sm:$0xff]
  %v1319 = vld [vmem:[%s5 + $0x1a8] sm:$0xff]
  %v1320 = vld [vmem:[%s5 + $0x1b0] sm:$0xff]
  %v1321 = vld [vmem:[%s5 + $0x1b8] sm:$0xff]
  %v1322 = vld [vmem:[%s5 + $0x1c0] sm:$0xff]
  %v1323 = vld [vmem:[%s5 + $0x1c8] sm:$0xff]
  %v1324 = vld [vmem:[%s5 + $0x1d0] sm:$0xff]
  %v1325 = vld [vmem:[%s5 + $0x1d8] sm:$0xff]
  %v1326 = vld [vmem:[%s5 + $0x1e0] sm:$0xff]
  %v1327 = vld [vmem:[%s5 + $0x1e8] sm:$0xff]
  %v1328 = vld [vmem:[%s5 + $0x1f0] sm:$0x33]
  %v1329 = vld [vmem:[%s6] sm:$0x3]
  %v1331 = vlaneseq
  %v1332 = vshrl.u32 %v1331, 7
  %v1333 = vsub.s32 0, %v1332
  %v1334 = vrot.slane %v1329, %v1333
  %v1335 = vlaneseq
  %v1336 = vshrl.u32 %v1335, 7
  %v1337 = vsub.s32 1, %v1336
  %v1338 = vrot.slane %v1329, %v1337
  %v1404 = vunpack.c.l.b16 %v1266
  %v1405 = vunpack.c.h.b16 %v1266
  %v1406 = vunpack.c.l.b16 %v1267
  %v1407 = vunpack.c.h.b16 %v1267
  %v1408 = vunpack.c.l.b16 %v1268
  %v1409 = vunpack.c.h.b16 %v1268
  %v1410 = vunpack.c.l.b16 %v1269
  %v1411 = vunpack.c.h.b16 %v1269
  %v1412 = vunpack.c.l.b16 %v1270
  %v1413 = vunpack.c.h.b16 %v1270
  %v1414 = vunpack.c.l.b16 %v1271
  %v1415 = vunpack.c.h.b16 %v1271
  %v1416 = vunpack.c.l.b16 %v1272
  %v1417 = vunpack.c.h.b16 %v1272
  %v1418 = vunpack.c.l.b16 %v1273
  %v1419 = vunpack.c.h.b16 %v1273
  %v1420 = vunpack.c.l.b16 %v1274
  %v1421 = vunpack.c.h.b16 %v1274
  %v1422 = vunpack.c.l.b16 %v1275
  %v1423 = vunpack.c.h.b16 %v1275
  %v1424 = vunpack.c.l.b16 %v1276
  %v1425 = vunpack.c.h.b16 %v1276
  %v1426 = vunpack.c.l.b16 %v1277
  %v1427 = vunpack.c.h.b16 %v1277
  %v1428 = vunpack.c.l.b16 %v1278
  %v1429 = vunpack.c.h.b16 %v1278
  %v1430 = vunpack.c.l.b16 %v1279
  %v1431 = vunpack.c.h.b16 %v1279
  %v1432 = vunpack.c.l.b16 %v1280
  %v1433 = vunpack.c.h.b16 %v1280
  %v1434 = vunpack.c.l.b16 %v1281
  %v1435 = vunpack.c.h.b16 %v1281
  %v1436 = vunpack.c.l.b16 %v1282
  %v1437 = vunpack.c.h.b16 %v1282
  %v1438 = vunpack.c.l.b16 %v1283
  %v1439 = vunpack.c.h.b16 %v1283
  %v1440 = vunpack.c.l.b16 %v1284
  %v1441 = vunpack.c.h.b16 %v1284
  %v1442 = vunpack.c.l.b16 %v1285
  %v1443 = vunpack.c.h.b16 %v1285
  %v1444 = vunpack.c.l.b16 %v1286
  %v1445 = vunpack.c.h.b16 %v1286
  %v1446 = vunpack.c.l.b16 %v1287
  %v1447 = vunpack.c.h.b16 %v1287
  %v1448 = vunpack.c.l.b16 %v1288
  %v1449 = vunpack.c.h.b16 %v1288
  %v1450 = vunpack.c.l.b16 %v1289
  %v1451 = vunpack.c.h.b16 %v1289
  %v1452 = vunpack.c.l.b16 %v1290
  %v1453 = vunpack.c.h.b16 %v1290
  %v1454 = vunpack.c.l.b16 %v1291
  %v1455 = vunpack.c.h.b16 %v1291
  %v1456 = vunpack.c.l.b16 %v1292
  %v1457 = vunpack.c.h.b16 %v1292
  %v1458 = vunpack.c.l.b16 %v1293
  %v1459 = vunpack.c.h.b16 %v1293
  %v1460 = vunpack.c.l.b16 %v1294
  %v1461 = vunpack.c.h.b16 %v1294
  %v1462 = vunpack.c.l.b16 %v1295
  %v1463 = vunpack.c.h.b16 %v1295
  %v1464 = vunpack.c.l.b16 %v1296
  %v1465 = vunpack.c.h.b16 %v1296
  %v1466 = vunpack.c.l.b16 %v1297
  %v1467 = vunpack.c.h.b16 %v1297
  %v1468 = vunpack.c.l.b16 %v1298
  %v1469 = vunpack.c.h.b16 %v1298
  %v1470 = vunpack.c.l.b16 %v1299
  %v1471 = vunpack.c.h.b16 %v1299
  %v1472 = vunpack.c.l.b16 %v1300
  %v1473 = vunpack.c.h.b16 %v1300
  %v1474 = vunpack.c.l.b16 %v1301
  %v1475 = vunpack.c.h.b16 %v1301
  %v1476 = vunpack.c.l.b16 %v1302
  %v1477 = vunpack.c.h.b16 %v1302
  %v1478 = vunpack.c.l.b16 %v1303
  %v1479 = vunpack.c.h.b16 %v1303
  %v1480 = vunpack.c.l.b16 %v1304
  %v1481 = vunpack.c.h.b16 %v1304
  %v1482 = vunpack.c.l.b16 %v1305
  %v1483 = vunpack.c.h.b16 %v1305
  %v1484 = vunpack.c.l.b16 %v1306
  %v1485 = vunpack.c.h.b16 %v1306
  %v1486 = vunpack.c.l.b16 %v1307
  %v1487 = vunpack.c.h.b16 %v1307
  %v1488 = vunpack.c.l.b16 %v1308
  %v1489 = vunpack.c.h.b16 %v1308
  %v1490 = vunpack.c.l.b16 %v1309
  %v1491 = vunpack.c.h.b16 %v1309
  %v1492 = vunpack.c.l.b16 %v1310
  %v1493 = vunpack.c.h.b16 %v1310
  %v1494 = vunpack.c.l.b16 %v1311
  %v1495 = vunpack.c.h.b16 %v1311
  %v1496 = vunpack.c.l.b16 %v1312
  %v1497 = vunpack.c.h.b16 %v1312
  %v1498 = vunpack.c.l.b16 %v1313
  %v1499 = vunpack.c.h.b16 %v1313
  %v1500 = vunpack.c.l.b16 %v1314
  %v1501 = vunpack.c.h.b16 %v1314
  %v1502 = vunpack.c.l.b16 %v1315
  %v1503 = vunpack.c.h.b16 %v1315
  %v1504 = vunpack.c.l.b16 %v1316
  %v1505 = vunpack.c.h.b16 %v1316
  %v1506 = vunpack.c.l.b16 %v1317
  %v1507 = vunpack.c.h.b16 %v1317
  %v1508 = vunpack.c.l.b16 %v1318
  %v1509 = vunpack.c.h.b16 %v1318
  %v1510 = vunpack.c.l.b16 %v1319
  %v1511 = vunpack.c.h.b16 %v1319
  %v1512 = vunpack.c.l.b16 %v1320
  %v1513 = vunpack.c.h.b16 %v1320
  %v1514 = vunpack.c.l.b16 %v1321
  %v1515 = vunpack.c.h.b16 %v1321
  %v1516 = vunpack.c.l.b16 %v1322
  %v1517 = vunpack.c.h.b16 %v1322
  %v1518 = vunpack.c.l.b16 %v1323
  %v1519 = vunpack.c.h.b16 %v1323
  %v1520 = vunpack.c.l.b16 %v1324
  %v1521 = vunpack.c.h.b16 %v1324
  %v1522 = vunpack.c.l.b16 %v1325
  %v1523 = vunpack.c.h.b16 %v1325
  %v1524 = vunpack.c.l.b16 %v1326
  %v1525 = vunpack.c.h.b16 %v1326
  %v1526 = vunpack.c.l.b16 %v1327
  %v1527 = vunpack.c.h.b16 %v1327
  %v1528 = vunpack.c.l.b16 %v1328
  %v1529 = vunpack.c.h.b16 %v1328
  %v1530 = vpack.c.b16 %v1406, %v1404
  %v1531 = vpack.c.b16 %v1407, %v1405
  %v1532 = vpack.c.b16 %v1410, %v1408
  %v1533 = vpack.c.b16 %v1411, %v1409
  %v1534 = vpack.c.b16 %v1414, %v1412
  %v1535 = vpack.c.b16 %v1415, %v1413
  %v1536 = vpack.c.b16 %v1418, %v1416
  %v1537 = vpack.c.b16 %v1419, %v1417
  %v1538 = vpack.c.b16 %v1422, %v1420
  %v1539 = vpack.c.b16 %v1423, %v1421
  %v1540 = vpack.c.b16 %v1426, %v1424
  %v1541 = vpack.c.b16 %v1427, %v1425
  %v1542 = vpack.c.b16 %v1430, %v1428
  %v1543 = vpack.c.b16 %v1431, %v1429
  %v1544 = vpack.c.b16 %v1434, %v1432
  %v1545 = vpack.c.b16 %v1435, %v1433
  %v1546 = vpack.c.b16 %v1438, %v1436
  %v1547 = vpack.c.b16 %v1439, %v1437
  %v1548 = vpack.c.b16 %v1442, %v1440
  %v1549 = vpack.c.b16 %v1443, %v1441
  %v1550 = vpack.c.b16 %v1446, %v1444
  %v1551 = vpack.c.b16 %v1447, %v1445
  %v1552 = vpack.c.b16 %v1450, %v1448
  %v1553 = vpack.c.b16 %v1451, %v1449
  %v1554 = vpack.c.b16 %v1454, %v1452
  %v1555 = vpack.c.b16 %v1455, %v1453
  %v1556 = vpack.c.b16 %v1458, %v1456
  %v1557 = vpack.c.b16 %v1459, %v1457
  %v1558 = vpack.c.b16 %v1462, %v1460
  %v1559 = vpack.c.b16 %v1463, %v1461
  %v1560 = vpack.c.b16 %v1466, %v1464
  %v1561 = vpack.c.b16 %v1467, %v1465
  %v1562 = vpack.c.b16 %v1470, %v1468
  %v1563 = vpack.c.b16 %v1471, %v1469
  %v1564 = vpack.c.b16 %v1474, %v1472
  %v1565 = vpack.c.b16 %v1475, %v1473
  %v1566 = vpack.c.b16 %v1478, %v1476
  %v1567 = vpack.c.b16 %v1479, %v1477
  %v1568 = vpack.c.b16 %v1482, %v1480
  %v1569 = vpack.c.b16 %v1483, %v1481
  %v1570 = vpack.c.b16 %v1486, %v1484
  %v1571 = vpack.c.b16 %v1487, %v1485
  %v1572 = vpack.c.b16 %v1490, %v1488
  %v1573 = vpack.c.b16 %v1491, %v1489
  %v1574 = vpack.c.b16 %v1494, %v1492
  %v1575 = vpack.c.b16 %v1495, %v1493
  %v1576 = vpack.c.b16 %v1498, %v1496
  %v1577 = vpack.c.b16 %v1499, %v1497
  %v1578 = vpack.c.b16 %v1502, %v1500
  %v1579 = vpack.c.b16 %v1503, %v1501
  %v1580 = vpack.c.b16 %v1506, %v1504
  %v1581 = vpack.c.b16 %v1507, %v1505
  %v1582 = vpack.c.b16 %v1510, %v1508
  %v1583 = vpack.c.b16 %v1511, %v1509
  %v1584 = vpack.c.b16 %v1514, %v1512
  %v1585 = vpack.c.b16 %v1515, %v1513
  %v1586 = vpack.c.b16 %v1518, %v1516
  %v1587 = vpack.c.b16 %v1519, %v1517
  %v1588 = vpack.c.b16 %v1522, %v1520
  %v1589 = vpack.c.b16 %v1523, %v1521
  %v1590 = vpack.c.b16 %v1526, %v1524
  %v1591 = vpack.c.b16 %v1527, %v1525
  %v1592 = vpack.c.b16 %v1528, %v1528
  %v1593 = vpack.c.b16 %v1529, %v1529
  %v1657 = vsel %vm1069, %v1265, 0
  %v1660 = vsel %vm1073, %v1592, 0
  %v1663 = vsel %vm1073, %v1593, 0
  %1665 = vmatprep.subr.bf16.mxu0 %v1531
  %1666 = vmatpush1.bf16.msra.mxu0 %v1530
  %1667 = vmatprep.subr.bf16.mxu0 %v1533
  %1668 = vmatpush1.bf16.msra.mxu0 %v1532
  %1669 = vmatprep.subr.bf16.mxu0 %v1535
  %1670 = vmatpush1.bf16.msra.mxu0 %v1534
  %1671 = vmatprep.subr.bf16.mxu0 %v1537
  %1672 = vmatpush1.bf16.msra.mxu0 %v1536
  %1673 = vmatprep.subr.bf16.mxu0 %v1539
  %1674 = vmatpush1.bf16.msra.mxu0 %v1538
  %1675 = vmatprep.subr.bf16.mxu0 %v1541
  %1676 = vmatpush1.bf16.msra.mxu0 %v1540
  %1677 = vmatprep.subr.bf16.mxu0 %v1543
  %1678 = vmatpush1.bf16.msra.mxu0 %v1542
  %1679 = vmatprep.subr.bf16.mxu0 %v1545
  %1680 = vmatpush1.bf16.msra.mxu0 %v1544
  %1681 = vmatprep.subr.bf16.mxu0 %v1547
  %1682 = vmatpush1.bf16.msra.mxu0 %v1546
  %1683 = vmatprep.subr.bf16.mxu0 %v1549
  %1684 = vmatpush1.bf16.msra.mxu0 %v1548
  %1685 = vmatprep.subr.bf16.mxu0 %v1551
  %1686 = vmatpush1.bf16.msra.mxu0 %v1550
  %1687 = vmatprep.subr.bf16.mxu0 %v1553
  %1688 = vmatpush1.bf16.msra.mxu0 %v1552
  %1689 = vmatprep.subr.bf16.mxu0 %v1555
  %1690 = vmatpush1.bf16.msra.mxu0 %v1554
  %1691 = vmatprep.subr.bf16.mxu0 %v1557
  %1692 = vmatpush1.bf16.msra.mxu0 %v1556
  %1693 = vmatprep.subr.bf16.mxu0 %v1559
  %1694 = vmatpush1.bf16.msra.mxu0 %v1558
  %1695 = vmatprep.subr.bf16.mxu0 %v1561
  %1696 = vmatpush1.bf16.msra.mxu0 %v1560
  %1697 = vmatprep.mubr.bf16.mxu0 %v1263
  %1698 = vmatmul.mubr.bf16.gmra.mrb[0].mxu0 %v1262
  %v1699 = vpop.f32.mrb[0].mxu0
  %v1700 = vadd.f32 %v1334, %v1699
  %v1701 = vpop.f32.mrb[0].mxu0
  %v1702 = vadd.f32 %v1338, %v1701
  %v1703 = vpop.f32.mrb[0].mxu0
  %v1704 = vpop.f32.mrb[0].mxu0
  %1705 = vdwg.mxu0
  %1706 = vmatprep.subr.bf16.mxu0 %v1563
  %1707 = vmatpush1.bf16.msra.mxu0 %v1562
  %1708 = vmatprep.subr.bf16.mxu0 %v1565
  %1709 = vmatpush1.bf16.msra.mxu0 %v1564
  %1710 = vmatprep.subr.bf16.mxu0 %v1567
  %1711 = vmatpush1.bf16.msra.mxu0 %v1566
  %1712 = vmatprep.subr.bf16.mxu0 %v1569
  %1713 = vmatpush1.bf16.msra.mxu0 %v1568
  %1714 = vmatprep.subr.bf16.mxu0 %v1571
  %1715 = vmatpush1.bf16.msra.mxu0 %v1570
  %1716 = vmatprep.subr.bf16.mxu0 %v1573
  %1717 = vmatpush1.bf16.msra.mxu0 %v1572
  %1718 = vmatprep.subr.bf16.mxu0 %v1575
  %1719 = vmatpush1.bf16.msra.mxu0 %v1574
  %1720 = vmatprep.subr.bf16.mxu0 %v1577
  %1721 = vmatpush1.bf16.msra.mxu0 %v1576
  %1722 = vmatprep.subr.bf16.mxu0 %v1579
  %1723 = vmatpush1.bf16.msra.mxu0 %v1578
  %1724 = vmatprep.subr.bf16.mxu0 %v1581
  %1725 = vmatpush1.bf16.msra.mxu0 %v1580
  %1726 = vmatprep.subr.bf16.mxu0 %v1583
  %1727 = vmatpush1.bf16.msra.mxu0 %v1582
  %1728 = vmatprep.subr.bf16.mxu0 %v1585
  %1729 = vmatpush1.bf16.msra.mxu0 %v1584
  %1730 = vmatprep.subr.bf16.mxu0 %v1587
  %1731 = vmatpush1.bf16.msra.mxu0 %v1586
  %1732 = vmatprep.subr.bf16.mxu0 %v1589
  %1733 = vmatpush1.bf16.msra.mxu0 %v1588
  %1734 = vmatprep.subr.bf16.mxu0 %v1591
  %1735 = vmatpush1.bf16.msra.mxu0 %v1590
  %1736 = vmatprep.subr.bf16.mxu0 %v1663
  %1737 = vmatpush1.bf16.msra.mxu0 %v1660
  %1738 = vmatprep.mubr.bf16.mxu0 %v1657
  %1739 = vmatmul.mubr.bf16.gmra.mrb[0].mxu0 %v1264
  %v1740 = vpop.f32.mrb[0].mxu0
  %v1741 = vadd.f32 %v1700, %v1740
  %v1742 = vpop.f32.mrb[0].mxu0
  %v1743 = vadd.f32 %v1702, %v1742
  %v1744 = vpop.f32.mrb[0].mxu0
  %v1745 = vpop.f32.mrb[0].mxu0
  %1746 = vdwg.mxu0
  %vm1747 = vcmp.ge.f32.partialorder %v1741, 0.0
  %vm1748 = vcmp.ge.f32.partialorder %v1743, 0.0
  %v1749 = vmul.f32 %v1741, 0.01
  %v1750 = vmul.f32 %v1743, 0.01
  %v1751 = vsel %vm1747, %v1741, %v1749
  %v1752 = vsel %vm1748, %v1743, %v1750
  %v1753 = vld [vmem:[%s7] sm:$0xff]
  %v1754 = vld [vmem:[%s7 + $0x8] sm:$0xff]
  %v1755 = vld [vmem:[%s7 + $0x10] sm:$0xff]
  %v1756 = vld [vmem:[%s7 + $0x18] sm:$0xff]
  %v1757 = vld [vmem:[%s7 + $0x20] sm:$0xff]
  %v1758 = vld [vmem:[%s7 + $0x28] sm:$0xff]
  %v1759 = vld [vmem:[%s7 + $0x30] sm:$0xff]
  %v1760 = vld [vmem:[%s7 + $0x38] sm:$0xff]
  %v1761 = vld [vmem:[%s7 + $0x40] sm:$0xff]
  %v1762 = vld [vmem:[%s7 + $0x48] sm:$0xff]
  %v1763 = vld [vmem:[%s7 + $0x50] sm:$0xff]
  %v1764 = vld [vmem:[%s7 + $0x58] sm:$0xff]
  %v1765 = vld [vmem:[%s7 + $0x60] sm:$0xff]
  %v1766 = vld [vmem:[%s7 + $0x68] sm:$0xff]
  %v1767 = vld [vmem:[%s7 + $0x70] sm:$0xff]
  %v1768 = vld [vmem:[%s7 + $0x78] sm:$0xff]
  %v1769 = vld [vmem:[%s7 + $0x80] sm:$0xff]
  %v1770 = vld [vmem:[%s7 + $0x88] sm:$0xff]
  %v1771 = vld [vmem:[%s7 + $0x90] sm:$0x3f]
  %v1772 = vld [vmem:[%s8] sm:$0x1]
  %v1774 = vlaneseq
  %v1775 = vshrl.u32 %v1774, 7
  %v1776 = vsub.s32 0, %v1775
  %v1777 = vrot.slane %v1772, %v1776
  %vm1779 = vcmask 179200
  %v1781 = vsel %vm1779, %v1752, 0
  %vm1783 = vcmask 1045504
  %v1785 = vsel %vm1783, %v1771, 0
  %1787 = vmatprep.subr.mxu0 0.0
  %1788 = vmatpush1.msra.mxu0 %v1753
  %1789 = vmatprep.subr.mxu0 0.0
  %1790 = vmatpush1.msra.mxu0 %v1754
  %1791 = vmatprep.subr.mxu0 0.0
  %1792 = vmatpush1.msra.mxu0 %v1755
  %1793 = vmatprep.subr.mxu0 0.0
  %1794 = vmatpush1.msra.mxu0 %v1756
  %1795 = vmatprep.subr.mxu0 0.0
  %1796 = vmatpush1.msra.mxu0 %v1757
  %1797 = vmatprep.subr.mxu0 0.0
  %1798 = vmatpush1.msra.mxu0 %v1758
  %1799 = vmatprep.subr.mxu0 0.0
  %1800 = vmatpush1.msra.mxu0 %v1759
  %1801 = vmatprep.subr.mxu0 0.0
  %1802 = vmatpush1.msra.mxu0 %v1760
  %1803 = vmatprep.subr.mxu0 0.0
  %1804 = vmatpush1.msra.mxu0 %v1761
  %1805 = vmatprep.subr.mxu0 0.0
  %1806 = vmatpush1.msra.mxu0 %v1762
  %1807 = vmatprep.subr.mxu0 0.0
  %1808 = vmatpush1.msra.mxu0 %v1763
  %1809 = vmatprep.subr.mxu0 0.0
  %1810 = vmatpush1.msra.mxu0 %v1764
  %1811 = vmatprep.subr.mxu0 0.0
  %1812 = vmatpush1.msra.mxu0 %v1765
  %1813 = vmatprep.subr.mxu0 0.0
  %1814 = vmatpush1.msra.mxu0 %v1766
  %1815 = vmatprep.subr.mxu0 0.0
  %1816 = vmatpush1.msra.mxu0 %v1767
  %1817 = vmatprep.subr.mxu0 0.0
  %1818 = vmatpush1.msra.mxu0 %v1768
  %1819 = vmatprep.subr.mxu0 0.0
  %1820 = vmatpush1.msra.mxu0 %v1769
  %1821 = vmatprep.subr.mxu0 0.0
  %1822 = vmatpush1.msra.mxu0 %v1770
  %1823 = vmatprep.subr.mxu0 0.0
  %1824 = vmatpush1.msra.mxu0 %v1785
  %1825 = vmatprep.subr.mxu0 0.0
  %1826 = vmatpush1.msra.mxu0 0.0
  %1827 = vmatprep.subr.mxu0 0.0
  %1828 = vmatpush1.msra.mxu0 0.0
  %1829 = vmatprep.subr.mxu0 0.0
  %1830 = vmatpush1.msra.mxu0 0.0
  %1831 = vmatprep.subr.mxu0 0.0
  %1832 = vmatpush1.msra.mxu0 0.0
  %1833 = vmatprep.subr.mxu0 0.0
  %1834 = vmatpush1.msra.mxu0 0.0
  %1835 = vmatprep.subr.mxu0 0.0
  %1836 = vmatpush1.msra.mxu0 0.0
  %1837 = vmatprep.subr.mxu0 0.0
  %1838 = vmatpush1.msra.mxu0 0.0
  %1839 = vmatprep.subr.mxu0 0.0
  %1840 = vmatpush1.msra.mxu0 0.0
  %1841 = vmatprep.subr.mxu0 0.0
  %1842 = vmatpush1.msra.mxu0 0.0
  %1843 = vmatprep.subr.mxu0 0.0
  %1844 = vmatpush1.msra.mxu0 0.0
  %1845 = vmatprep.subr.mxu0 0.0
  %1846 = vmatpush1.msra.mxu0 0.0
  %1847 = vmatprep.subr.mxu0 0.0
  %1848 = vmatpush1.msra.mxu0 0.0
  %1849 = vmatprep.subr.mxu0 0.0
  %1850 = vmatpush1.msra.mxu0 0.0
  %1851 = vmatprep.mubr.f32.mxu0 %v1781
  %1852 = vmatmul.mubr.f32.gmra.mrb[0].mxu0 %v1751
  %v1853 = vpop.f32.mrb[0].mxu0
  %v1854 = vadd.f32 %v1777, %v1853
  %v1855 = vpop.f32.mrb[0].mxu0
  %1856 = vdwg.mxu0
  %vm1857 = vcmp.ge.f32.partialorder %v1854, 0.0
  %v1858 = vmul.f32 %v1854, 0.01
  %v1859 = vsel %vm1857, %v1854, %v1858
  %v1860 = vld [vmem:[%s9] sm:$0xff]
  %v1861 = vld [vmem:[%s9 + $0x8] sm:$0xff]
  %v1862 = vld [vmem:[%s9 + $0x10] sm:$0xff]
  %v1863 = vld [vmem:[%s9 + $0x18] sm:$0xff]
  %v1864 = vld [vmem:[%s10] sm:$0x1]
  %v1866 = vlaneseq
  %v1867 = vshrl.u32 %v1866, 7
  %v1868 = vsub.s32 0, %v1867
  %v1869 = vrot.slane %v1864, %v1868
  %vm1871 = vcmask 261120
  %v1873 = vsel %vm1871, %v1859, 0
  %1875 = vmatprep.subr.mxu0 0.0
  %1876 = vmatpush1.msra.mxu0 %v1860
  %1877 = vmatprep.subr.mxu0 0.0
  %1878 = vmatpush1.msra.mxu0 %v1861
  %1879 = vmatprep.subr.mxu0 0.0
  %1880 = vmatpush1.msra.mxu0 %v1862
  %1881 = vmatprep.subr.mxu0 0.0
  %1882 = vmatpush1.msra.mxu0 %v1863
  %1883 = vmatprep.subr.mxu0 0.0
  %1884 = vmatpush1.msra.mxu0 0.0
  %1885 = vmatprep.subr.mxu0 0.0
  %1886 = vmatpush1.msra.mxu0 0.0
  %1887 = vmatprep.subr.mxu0 0.0
  %1888 = vmatpush1.msra.mxu0 0.0
  %1889 = vmatprep.subr.mxu0 0.0
  %1890 = vmatpush1.msra.mxu0 0.0
  %1891 = vmatprep.subr.mxu0 0.0
  %1892 = vmatpush1.msra.mxu0 0.0
  %1893 = vmatprep.subr.mxu0 0.0
  %1894 = vmatpush1.msra.mxu0 0.0
  %1895 = vmatprep.subr.mxu0 0.0
  %1896 = vmatpush1.msra.mxu0 0.0
  %1897 = vmatprep.subr.mxu0 0.0
  %1898 = vmatpush1.msra.mxu0 0.0
  %1899 = vmatprep.subr.mxu0 0.0
  %1900 = vmatpush1.msra.mxu0 0.0
  %1901 = vmatprep.subr.mxu0 0.0
  %1902 = vmatpush1.msra.mxu0 0.0
  %1903 = vmatprep.subr.mxu0 0.0
  %1904 = vmatpush1.msra.mxu0 0.0
  %1905 = vmatprep.subr.mxu0 0.0
  %1906 = vmatpush1.msra.mxu0 0.0
  %1907 = vmatprep.subr.mxu0 0.0
  %1908 = vmatpush1.msra.mxu0 0.0
  %1909 = vmatprep.subr.mxu0 0.0
  %1910 = vmatpush1.msra.mxu0 0.0
  %1911 = vmatprep.subr.mxu0 0.0
  %1912 = vmatpush1.msra.mxu0 0.0
  %1913 = vmatprep.subr.mxu0 0.0
  %1914 = vmatpush1.msra.mxu0 0.0
  %1915 = vmatprep.subr.mxu0 0.0
  %1916 = vmatpush1.msra.mxu0 0.0
  %1917 = vmatprep.subr.mxu0 0.0
  %1918 = vmatpush1.msra.mxu0 0.0
  %1919 = vmatprep.subr.mxu0 0.0
  %1920 = vmatpush1.msra.mxu0 0.0
  %1921 = vmatprep.subr.mxu0 0.0
  %1922 = vmatpush1.msra.mxu0 0.0
  %1923 = vmatprep.subr.mxu0 0.0
  %1924 = vmatpush1.msra.mxu0 0.0
  %1925 = vmatprep.subr.mxu0 0.0
  %1926 = vmatpush1.msra.mxu0 0.0
  %1927 = vmatprep.subr.mxu0 0.0
  %1928 = vmatpush1.msra.mxu0 0.0
  %1929 = vmatprep.subr.mxu0 0.0
  %1930 = vmatpush1.msra.mxu0 0.0
  %1931 = vmatprep.subr.mxu0 0.0
  %1932 = vmatpush1.msra.mxu0 0.0
  %1933 = vmatprep.subr.mxu0 0.0
  %1934 = vmatpush1.msra.mxu0 0.0
  %1935 = vmatprep.subr.mxu0 0.0
  %1936 = vmatpush1.msra.mxu0 0.0
  %1937 = vmatprep.subr.mxu0 0.0
  %1938 = vmatpush1.msra.mxu0 0.0
  %1939 = vmatprep.mubr.f32.mxu0 0.0
  %1940 = vmatmul.mubr.f32.gmra.mrb[0].mxu0 %v1873
  %v1941 = vpop.f32.mrb[0].mxu0
  %v1942 = vadd.f32 %v1869, %v1941
  %v1943 = vpop.f32.mrb[0].mxu0
  %1944 = vdwg.mxu0
  %vm1945 = vcmp.ge.f32.partialorder %v1942, 0.0
  %v1946 = vmul.f32 %v1942, 0.01
  %v1947 = vsel %vm1945, %v1942, %v1946
  %v1948 = vld [vmem:[%s11] sm:$0xff]
  %v1949 = vld [vmem:[%s11 + $0x8] sm:$0xff]
  %v1950 = vld [vmem:[%s11 + $0x10] sm:$0xff]
  %v1951 = vld [vmem:[%s11 + $0x18] sm:$0xff]
  %v1952 = vld [vmem:[%s12] sm:$0x1]
  %v1954 = vlaneseq
  %v1955 = vshrl.u32 %v1954, 7
  %v1956 = vsub.s32 0, %v1955
  %v1957 = vrot.slane %v1952, %v1956
  %v1960 = vsel %vm1871, %v1947, 0
  %1962 = vmatprep.subr.mxu0 0.0
  %1963 = vmatpush1.msra.mxu0 %v1948
  %1964 = vmatprep.subr.mxu0 0.0
  %1965 = vmatpush1.msra.mxu0 %v1949
  %1966 = vmatprep.subr.mxu0 0.0
  %1967 = vmatpush1.msra.mxu0 %v1950
  %1968 = vmatprep.subr.mxu0 0.0
  %1969 = vmatpush1.msra.mxu0 %v1951
  %1970 = vmatprep.subr.mxu0 0.0
  %1971 = vmatpush1.msra.mxu0 0.0
  %1972 = vmatprep.subr.mxu0 0.0
  %1973 = vmatpush1.msra.mxu0 0.0
  %1974 = vmatprep.subr.mxu0 0.0
  %1975 = vmatpush1.msra.mxu0 0.0
  %1976 = vmatprep.subr.mxu0 0.0
  %1977 = vmatpush1.msra.mxu0 0.0
  %1978 = vmatprep.subr.mxu0 0.0
  %1979 = vmatpush1.msra.mxu0 0.0
  %1980 = vmatprep.subr.mxu0 0.0
  %1981 = vmatpush1.msra.mxu0 0.0
  %1982 = vmatprep.subr.mxu0 0.0
  %1983 = vmatpush1.msra.mxu0 0.0
  %1984 = vmatprep.subr.mxu0 0.0
  %1985 = vmatpush1.msra.mxu0 0.0
  %1986 = vmatprep.subr.mxu0 0.0
  %1987 = vmatpush1.msra.mxu0 0.0
  %1988 = vmatprep.subr.mxu0 0.0
  %1989 = vmatpush1.msra.mxu0 0.0
  %1990 = vmatprep.subr.mxu0 0.0
  %1991 = vmatpush1.msra.mxu0 0.0
  %1992 = vmatprep.subr.mxu0 0.0
  %1993 = vmatpush1.msra.mxu0 0.0
  %1994 = vmatprep.subr.mxu0 0.0
  %1995 = vmatpush1.msra.mxu0 0.0
  %1996 = vmatprep.subr.mxu0 0.0
  %1997 = vmatpush1.msra.mxu0 0.0
  %1998 = vmatprep.subr.mxu0 0.0
  %1999 = vmatpush1.msra.mxu0 0.0
  %2000 = vmatprep.subr.mxu0 0.0
  %2001 = vmatpush1.msra.mxu0 0.0
  %2002 = vmatprep.subr.mxu0 0.0
  %2003 = vmatpush1.msra.mxu0 0.0
  %2004 = vmatprep.subr.mxu0 0.0
  %2005 = vmatpush1.msra.mxu0 0.0
  %2006 = vmatprep.subr.mxu0 0.0
  %2007 = vmatpush1.msra.mxu0 0.0
  %2008 = vmatprep.subr.mxu0 0.0
  %2009 = vmatpush1.msra.mxu0 0.0
  %2010 = vmatprep.subr.mxu0 0.0
  %2011 = vmatpush1.msra.mxu0 0.0
  %2012 = vmatprep.subr.mxu0 0.0
  %2013 = vmatpush1.msra.mxu0 0.0
  %2014 = vmatprep.subr.mxu0 0.0
  %2015 = vmatpush1.msra.mxu0 0.0
  %2016 = vmatprep.subr.mxu0 0.0
  %2017 = vmatpush1.msra.mxu0 0.0
  %2018 = vmatprep.subr.mxu0 0.0
  %2019 = vmatpush1.msra.mxu0 0.0
  %2020 = vmatprep.subr.mxu0 0.0
  %2021 = vmatpush1.msra.mxu0 0.0
  %2022 = vmatprep.subr.mxu0 0.0
  %2023 = vmatpush1.msra.mxu0 0.0
  %2024 = vmatprep.subr.mxu0 0.0
  %2025 = vmatpush1.msra.mxu0 0.0
  %2026 = vmatprep.mubr.f32.mxu0 0.0
  %2027 = vmatmul.mubr.f32.gmra.mrb[0].mxu0 %v1960
  %v2028 = vpop.f32.mrb[0].mxu0
  %v2029 = vadd.f32 %v1957, %v2028
  %v2030 = vpop.f32.mrb[0].mxu0
  %2031 = vdwg.mxu0
  %vm2032 = vcmask 48128
  %v2033 = vsel %vm2032, %v2029, -inf
  %2034 = vmax.xlane.f32.xlu0 %v2033
  %v2035 = vpop.xlane.xlu0 %2034
  %v2036 = vsub.f32 %v2029, %v2035
  %v2037 = vmul.f32 %v2036, 1.442695
  %v2038 = vpow.pop %v2037
  %v2039 = vsel %vm2032, %v2038, 0.0
  %2040 = vadd.xlane.f32.xlu0 %v2039
  %v2041 = vpop.xlane.xlu0 %2040
  %v2042 = vrcp.pop %v2041
  %v2043 = vmul.f32 %v2038, %v2042
  %2044 = vst.msk [vmem:[%s13] sm:$0xff] %vm2032, %v2043
  // Predicated region
  $region54: #{policy_net_forward.1} parent=0 // pred_check
    _
  $region55: #{policy_net_forward.1} parent=0 // pred_check_branch
    %2046 = sbr.rel (0) target = $region57
  $region56: #{policy_net_forward.1} parent=0 // pred_region
    _
  $region57: #{policy_net_forward.1} parent=0 // pred_fallthru
    _
  // Predicated region
  $region58: #{policy_net_forward.1} parent=0 // pred_check
    _
  $region59: #{policy_net_forward.1} parent=0 // pred_check_branch
    %2048 = sbr.rel (0) target = $region61
  $region60: #{policy_net_forward.1} parent=0 // pred_region
    _
  $region61: #{policy_net_forward.1} parent=0 // pred_fallthru
    _

</llo_original>
